<compile_context>
chip_gen: v5e
topology: v5e:2x2
jax: 0.10.0
libtpu: 0.0.40
codegen_flags: <defaults>
</compile_context>

<pallas_src>
import jax
import jax.numpy as jnp
from jax.experimental import pallas as pl
from jax.experimental.pallas import tpu as pltpu  # noqa: F401  (TPU backend)


# ----------------------------- Pallas kernels -------------------------------
def _conv12_kernel(col_ref, w1_ref, b1_ref, w2_ref, b2_ref, o_ref):
    """Fused conv1 GEMM + conv2 (1x1) GEMM; all operands VMEM resident,
    the (M, 16) intermediate never leaves the chip."""
    v1 = jnp.dot(col_ref[...], w1_ref[...],
                 preferred_element_type=jnp.float32) + b1_ref[...]
    v2 = jnp.dot(v1, w2_ref[...],
                 preferred_element_type=jnp.float32) + b2_ref[...]
    o_ref[...] = v2.astype(o_ref.dtype)


def _conv3_sigmoid_kernel(col_ref, w_ref, b_ref, o_ref):
    """conv3 GEMM + bias + fused sigmoid (abs is a no-op on sigmoid output)."""
    acc = jnp.dot(col_ref[...], w_ref[...],
                  preferred_element_type=jnp.float32) + b_ref[...]
    o_ref[...] = jax.nn.sigmoid(acc).astype(o_ref.dtype)


def _fused_conv1_conv2(col1, w1m, b1, w2m, b2):
    m = col1.shape[0]
    n_out = w2m.shape[1]
    return pl.pallas_call(
        _conv12_kernel,
        out_shape=jax.ShapeDtypeStruct((m, n_out), jnp.float32),
    )(col1, w1m, b1, w2m, b2)


def _conv3_gemm_sigmoid(col3, w3m, b3):
    m = col3.shape[0]
    n_out = w3m.shape[1]
    return pl.pallas_call(
        _conv3_sigmoid_kernel,
        out_shape=jax.ShapeDtypeStruct((m, n_out), jnp.float32),
    )(col3, w3m, b3)


# ------------------------------ im2col glue ---------------------------------
def _out_size(size, k, stride, pad, dil):
    return (size + 2 * pad - dil * (k - 1) - 1) // stride + 1


def _im2col_nhwc(x, kh, kw, stride, padding, dilation):
    """NHWC im2col.  Returns (N*Ho*Wo, kh*kw*C) with K ordered (kh, kw, c).
    Built as lane-dense channel concatenations (no transposes); runs inside
    the jitted XLA program around the Pallas GEMMs."""
    n, h, w, c = x.shape
    sh, sw = stride
    ph, pw = padding
    dh, dw = dilation
    ho = _out_size(h, kh, sh, ph, dh)
    wo = _out_size(w, kw, sw, pw, dw)
    xp = jnp.pad(x, ((0, 0), (ph, ph), (pw, pw), (0, 0)))
    cols = []
    for ih in range(kh):
        for iw in range(kw):
            h0 = ih * dh
            w0 = iw * dw
            cols.append(xp[:, h0:h0 + sh * (ho - 1) + 1:sh,
                           w0:w0 + sw * (wo - 1) + 1:sw, :])
    col = jnp.concatenate(cols, axis=-1)             # (N, Ho, Wo, kh*kw*C)
    return col.reshape(n * ho * wo, kh * kw * c), ho, wo


# ------------------------------ Parameters ----------------------------------
def init_params(key):
    k1, k2, k3, k4, k5, k6 = jax.random.split(key, 6)

    def conv_init(kw_key, kb_key, c_out, c_in, kh, kwid):
        fan_in = c_in * kh * kwid
        bound = 1.0 / jnp.sqrt(fan_in)
        w = jax.random.uniform(kw_key, (c_out, c_in, kh, kwid),
                               minval=-bound, maxval=bound, dtype=jnp.float32)
        b = jax.random.uniform(kb_key, (c_out,),
                               minval=-bound, maxval=bound, dtype=jnp.float32)
        return w, b

    w1, b1 = conv_init(k1, k2, 16, 3, 5, 9)
    w2, b2 = conv_init(k3, k4, 32, 16, 1, 1)
    w3, b3 = conv_init(k5, k6, 48, 32, 3, 8)
    return (w1, b1), (w2, b2), (w3, b3)


def prepare_inference_params(params):
    """Reshape OIHW weights to (kh*kw*C_in, C_out) GEMM matrices once, outside
    the forward pass (no per-call re-packing / re-padding)."""
    (w1, b1), (w2, b2), (w3, b3) = params

    def to_mat(w):
        c_out, c_in, kh, kw = w.shape
        return jnp.transpose(w, (2, 3, 1, 0)).reshape(kh * kw * c_in, c_out)

    return (to_mat(w1), b1.reshape(1, -1),
            to_mat(w2), b2.reshape(1, -1),
            to_mat(w3), b3.reshape(1, -1))


# -------------------------------- Forward -----------------------------------
def model_forward(x_nchw, iparams):
    w1m, b1, w2m, b2, w3m, b3 = iparams
    n = x_nchw.shape[0]
    x = jnp.transpose(x_nchw, (0, 2, 3, 1))                        # NHWC once
    col1, ho1, wo1 = _im2col_nhwc(x, 5, 9, (2, 2), (9, 9), (1, 1))
    v2 = _fused_conv1_conv2(col1, w1m, b1, w2m, b2)                # (M1, 32)
    v2 = v2.reshape(n, ho1, wo1, w2m.shape[1])
    col3, ho3, wo3 = _im2col_nhwc(v2, 3, 8, (2, 2), (3, 3), (3, 3))
    y = _conv3_gemm_sigmoid(col3, w3m, b3)                         # (M3, 48)
    y = y.reshape(n, ho3, wo3, w3m.shape[1])
    return jnp.transpose(y, (0, 3, 1, 2))                          # NCHW once


def _reference_forward(x, params):
    """Pure-JAX reference (lax conv) for correctness checking."""
    (w1, b1), (w2, b2), (w3, b3) = params

    def conv(x, w, b, stride, padding, dilation):
        y = jax.lax.conv_general_dilated(
            x, w, window_strides=stride,
            padding=[(padding[0], padding[0]), (padding[1], padding[1])],
            rhs_dilation=dilation,
            dimension_numbers=("NCHW", "OIHW", "NCHW"))
        return y + b.reshape(1, -1, 1, 1)

    v1 = conv(x, w1, b1, (2, 2), (9, 9), (1, 1))
    v2 = conv(v1, w2, b2, (1, 1), (0, 0), (1, 1))
    v3 = conv(v2, w3, b3, (2, 2), (3, 3), (3, 3))
    return jnp.abs(jax.nn.sigmoid(v3))


if __name__ == "__main__":
    key = jax.random.PRNGKey(0)
    kx, kp = jax.random.split(key)

    # Small input consistent with the module: 3 input channels, NCHW.
    x = jax.random.normal(kx, (1, 3, 32, 32), dtype=jnp.float32)
    params = init_params(kp)
    iparams = prepare_inference_params(params)

    fwd = jax.jit(model_forward)
    out = jax.block_until_ready(fwd(x, iparams))

    ref = jax.block_until_ready(_reference_forward(x, params))
    assert out.shape == ref.shape, (out.shape, ref.shape)
    assert jnp.allclose(out, ref, atol=1e-4, rtol=1e-4), "mismatch vs reference"

    print("KERNEL_OK")
</pallas_src>

<mosaic_0001>
module attributes {stable_mosaic.version = 11 : i64} {
  func.func @_conv12_kernel(%arg0: memref<483x135xf32, #tpu.memory_space<vmem>>, %arg1: memref<135x16xf32, #tpu.memory_space<vmem>>, %arg2: memref<1x16xf32, #tpu.memory_space<vmem>>, %arg3: memref<16x32xf32, #tpu.memory_space<vmem>>, %arg4: memref<1x32xf32, #tpu.memory_space<vmem>>, %arg5: memref<483x32xf32, #tpu.memory_space<vmem>>) attributes {dimension_semantics = [], scalar_prefetch = 0 : i64, scratch_operands = 0 : i64, tpu.core_type = #tpu.core_type<tc>} {
    %c0 = arith.constant 0 : index
    %c0_0 = arith.constant 0 : index
    %0 = vector.load %arg0[%c0, %c0_0] : memref<483x135xf32, #tpu.memory_space<vmem>>, vector<483x135xf32>
    %c0_1 = arith.constant 0 : index
    %c0_2 = arith.constant 0 : index
    %1 = vector.load %arg1[%c0_1, %c0_2] : memref<135x16xf32, #tpu.memory_space<vmem>>, vector<135x16xf32>
    %cst = arith.constant dense<0.000000e+00> : vector<483x16xf32>
    %2 = tpu.matmul %0, %1, %cst {dimension_numbers = #tpu.dot_dimension_numbers<[1], [0], [0], [1], [0, 0, 1, 1], [], []>} : vector<483x135xf32>, vector<135x16xf32>, vector<483x16xf32> -> vector<483x16xf32>
    %c0_3 = arith.constant 0 : index
    %c0_4 = arith.constant 0 : index
    %3 = vector.load %arg2[%c0_3, %c0_4] : memref<1x16xf32, #tpu.memory_space<vmem>>, vector<1x16xf32>
    %4 = vector.broadcast %3 : vector<1x16xf32> to vector<483x16xf32>
    %5 = arith.addf %2, %4 : vector<483x16xf32>
    %c0_5 = arith.constant 0 : index
    %c0_6 = arith.constant 0 : index
    %6 = vector.load %arg3[%c0_5, %c0_6] : memref<16x32xf32, #tpu.memory_space<vmem>>, vector<16x32xf32>
    %cst_7 = arith.constant dense<0.000000e+00> : vector<483x32xf32>
    %7 = tpu.matmul %5, %6, %cst_7 {dimension_numbers = #tpu.dot_dimension_numbers<[1], [0], [0], [1], [0, 0, 1, 1], [], []>} : vector<483x16xf32>, vector<16x32xf32>, vector<483x32xf32> -> vector<483x32xf32>
    %c0_8 = arith.constant 0 : index
    %c0_9 = arith.constant 0 : index
    %8 = vector.load %arg4[%c0_8, %c0_9] : memref<1x32xf32, #tpu.memory_space<vmem>>, vector<1x32xf32>
    %9 = vector.broadcast %8 : vector<1x32xf32> to vector<483x32xf32>
    %10 = arith.addf %7, %9 : vector<483x32xf32>
    %c0_10 = arith.constant 0 : index
    %c0_11 = arith.constant 0 : index
    %11 = vector.load %arg5[%c0_10, %c0_11] : memref<483x32xf32, #tpu.memory_space<vmem>>, vector<483x32xf32>
    tpu.vector_store %arg5[%c0_10, %c0_11], %10 {strides = array<i32>} : memref<483x32xf32, #tpu.memory_space<vmem>>, vector<483x32xf32>,
    return
  }
}

module attributes {stable_mosaic.version = 11 : i64} {
  func.func @_conv3_sigmoid_kernel(%arg0: memref<36x768xf32, #tpu.memory_space<vmem>>, %arg1: memref<768x48xf32, #tpu.memory_space<vmem>>, %arg2: memref<1x48xf32, #tpu.memory_space<vmem>>, %arg3: memref<36x48xf32, #tpu.memory_space<vmem>>) attributes {dimension_semantics = [], scalar_prefetch = 0 : i64, scratch_operands = 0 : i64, tpu.core_type = #tpu.core_type<tc>} {
    %c0 = arith.constant 0 : index
    %c0_0 = arith.constant 0 : index
    %0 = vector.load %arg0[%c0, %c0_0] : memref<36x768xf32, #tpu.memory_space<vmem>>, vector<36x768xf32>
    %c0_1 = arith.constant 0 : index
    %c0_2 = arith.constant 0 : index
    %1 = vector.load %arg1[%c0_1, %c0_2] : memref<768x48xf32, #tpu.memory_space<vmem>>, vector<768x48xf32>
    %cst = arith.constant dense<0.000000e+00> : vector<36x48xf32>
    %2 = tpu.matmul %0, %1, %cst {dimension_numbers = #tpu.dot_dimension_numbers<[1], [0], [0], [1], [0, 0, 1, 1], [], []>} : vector<36x768xf32>, vector<768x48xf32>, vector<36x48xf32> -> vector<36x48xf32>
    %c0_3 = arith.constant 0 : index
    %c0_4 = arith.constant 0 : index
    %3 = vector.load %arg2[%c0_3, %c0_4] : memref<1x48xf32, #tpu.memory_space<vmem>>, vector<1x48xf32>
    %4 = vector.broadcast %3 : vector<1x48xf32> to vector<36x48xf32>
    %5 = arith.addf %2, %4 : vector<36x48xf32>
    %6 = arith.negf %5 : vector<36x48xf32>
    %7 = math.exp %6 : vector<36x48xf32>
    %cst_5 = arith.constant 1.000000e+00 : f32
    %8 = vector.broadcast %cst_5 : f32 to vector<36x48xf32>
    %9 = arith.addf %8, %7 : vector<36x48xf32>
    %10 = arith.divf %8, %9 : vector<36x48xf32>
    %c0_6 = arith.constant 0 : index
    %c0_7 = arith.constant 0 : index
    %11 = vector.load %arg3[%c0_6, %c0_7] : memref<36x48xf32, #tpu.memory_space<vmem>>, vector<36x48xf32>
    tpu.vector_store %arg3[%c0_6, %c0_7], %10 {strides = array<i32>} : memref<36x48xf32, #tpu.memory_space<vmem>>, vector<36x48xf32>,
    return
  }
}

</mosaic_0001>

<llo_original>
// kernel: model_forward.2
$region0: #{model_forward.2}
  #allocation0 [shape = 'u32[]', space=smem, size = 0x4, offset = 0x4, fixed_abs, tag = 'smem constant byte address 0x4 - core index']
  #allocation1 [shape = 'u32[72,128]{1,0:T(1,128)}', space=vmem, size = 0x9000, scoped, tag = 'internal scratch']
  %s0 = inlined_call_operand.vmem [shape: f32[483,135], index: 0, kind: input, shape index: {}]
  %s1 = inlined_call_operand.vmem [shape: f32[135,16], index: 1, kind: input, shape index: {}]
  %s2 = inlined_call_operand.vmem [shape: f32[1,16], index: 2, kind: input, shape index: {}]
  %s3 = inlined_call_operand.vmem [shape: f32[16,32], index: 3, kind: input, shape index: {}]
  %s4 = inlined_call_operand.vmem [shape: f32[1,32], index: 4, kind: input, shape index: {}]
  %s5 = inlined_call_operand.vmem [shape: f32[483,32], index: 5, kind: output, shape index: {}]
  %s6 = sld [smem:[#allocation0]]
  $region30: #{model_forward.2} parent=0
    _
  %s8 = ssub.s32 1, %s6
  %s9 = scalar_select 0, %s8, %s6
  // Predicated region
  $region2: #{model_forward.2} parent=0 // pred_check
    _
  $region3: #{model_forward.2} parent=0 // pred_check_branch
    %11 = sbr.rel (0) target = $region5
  $region4: #{model_forward.2} parent=0 // pred_region
    _
  $region5: #{model_forward.2} parent=0 // pred_fallthru
    _
  // Predicated region
  $region6: #{model_forward.2} parent=0 // pred_check
    _
  $region7: #{model_forward.2} parent=0 // pred_check_branch
    %13 = sbr.rel (0) target = $region9
  $region8: #{model_forward.2} parent=0 // pred_region
    _
  $region9: #{model_forward.2} parent=0 // pred_fallthru
    _
  // Predicated region
  $region10: #{model_forward.2} parent=0 // pred_check
    _
  $region11: #{model_forward.2} parent=0 // pred_check_branch
    %15 = sbr.rel (0) target = $region13
  $region12: #{model_forward.2} parent=0 // pred_region
    _
  $region13: #{model_forward.2} parent=0 // pred_fallthru
    _
  // Predicated region
  $region14: #{model_forward.2} parent=0 // pred_check
    _
  $region15: #{model_forward.2} parent=0 // pred_check_branch
    %17 = sbr.rel (0) target = $region17
  $region16: #{model_forward.2} parent=0 // pred_region
    _
  $region17: #{model_forward.2} parent=0 // pred_fallthru
    _
  // Predicated region
  $region18: #{model_forward.2} parent=0 // pred_check
    _
  $region19: #{model_forward.2} parent=0 // pred_check_branch
    %19 = sbr.rel (0) target = $region21
  $region20: #{model_forward.2} parent=0 // pred_region
    _
  $region21: #{model_forward.2} parent=0 // pred_fallthru
    _
  %v20 = vld [vmem:[%s0] sm:$0xff]
  %v21 = vld [vmem:[%s0 + $0x8] sm:$0xff]
  %v22 = vld [vmem:[%s0 + $0x10] sm:$0xff]
  %v23 = vld [vmem:[%s0 + $0x18] sm:$0xff]
  %v24 = vld [vmem:[%s0 + $0x20] sm:$0xff]
  %v25 = vld [vmem:[%s0 + $0x28] sm:$0xff]
  %v26 = vld [vmem:[%s0 + $0x30] sm:$0xff]
  %v27 = vld [vmem:[%s0 + $0x38] sm:$0xff]
  %v28 = vld [vmem:[%s0 + $0x40] sm:$0xff]
  %v29 = vld [vmem:[%s0 + $0x48] sm:$0xff]
  %v30 = vld [vmem:[%s0 + $0x50] sm:$0xff]
  %v31 = vld [vmem:[%s0 + $0x58] sm:$0xff]
  %v32 = vld [vmem:[%s0 + $0x60] sm:$0xff]
  %v33 = vld [vmem:[%s0 + $0x68] sm:$0xff]
  %v34 = vld [vmem:[%s0 + $0x70] sm:$0xff]
  %v35 = vld [vmem:[%s0 + $0x78] sm:$0xff]
  %v36 = vld [vmem:[%s0 + $0x80] sm:$0xff]
  %v37 = vld [vmem:[%s0 + $0x88] sm:$0xff]
  %v38 = vld [vmem:[%s0 + $0x90] sm:$0xff]
  %v39 = vld [vmem:[%s0 + $0x98] sm:$0xff]
  %v40 = vld [vmem:[%s0 + $0xa0] sm:$0xff]
  %v41 = vld [vmem:[%s0 + $0xa8] sm:$0xff]
  %v42 = vld [vmem:[%s0 + $0xb0] sm:$0xff]
  %v43 = vld [vmem:[%s0 + $0xb8] sm:$0xff]
  %v44 = vld [vmem:[%s0 + $0xc0] sm:$0xff]
  %v45 = vld [vmem:[%s0 + $0xc8] sm:$0xff]
  %v46 = vld [vmem:[%s0 + $0xd0] sm:$0xff]
  %v47 = vld [vmem:[%s0 + $0xd8] sm:$0xff]
  %v48 = vld [vmem:[%s0 + $0xe0] sm:$0xff]
  %v49 = vld [vmem:[%s0 + $0xe8] sm:$0xff]
  %v50 = vld [vmem:[%s0 + $0xf0] sm:$0xff]
  %v51 = vld [vmem:[%s0 + $0xf8] sm:$0xff]
  %v52 = vld [vmem:[%s0 + $0x100] sm:$0xff]
  %v53 = vld [vmem:[%s0 + $0x108] sm:$0xff]
  %v54 = vld [vmem:[%s0 + $0x110] sm:$0xff]
  %v55 = vld [vmem:[%s0 + $0x118] sm:$0xff]
  %v56 = vld [vmem:[%s0 + $0x120] sm:$0xff]
  %v57 = vld [vmem:[%s0 + $0x128] sm:$0xff]
  %v58 = vld [vmem:[%s0 + $0x130] sm:$0xff]
  %v59 = vld [vmem:[%s0 + $0x138] sm:$0xff]
  %v60 = vld [vmem:[%s0 + $0x140] sm:$0xff]
  %v61 = vld [vmem:[%s0 + $0x148] sm:$0xff]
  %v62 = vld [vmem:[%s0 + $0x150] sm:$0xff]
  %v63 = vld [vmem:[%s0 + $0x158] sm:$0xff]
  %v64 = vld [vmem:[%s0 + $0x160] sm:$0xff]
  %v65 = vld [vmem:[%s0 + $0x168] sm:$0xff]
  %v66 = vld [vmem:[%s0 + $0x170] sm:$0xff]
  %v67 = vld [vmem:[%s0 + $0x178] sm:$0xff]
  %v68 = vld [vmem:[%s0 + $0x180] sm:$0xff]
  %v69 = vld [vmem:[%s0 + $0x188] sm:$0xff]
  %v70 = vld [vmem:[%s0 + $0x190] sm:$0xff]
  %v71 = vld [vmem:[%s0 + $0x198] sm:$0xff]
  %v72 = vld [vmem:[%s0 + $0x1a0] sm:$0xff]
  %v73 = vld [vmem:[%s0 + $0x1a8] sm:$0xff]
  %v74 = vld [vmem:[%s0 + $0x1b0] sm:$0xff]
  %v75 = vld [vmem:[%s0 + $0x1b8] sm:$0xff]
  %v76 = vld [vmem:[%s0 + $0x1c0] sm:$0xff]
  %v77 = vld [vmem:[%s0 + $0x1c8] sm:$0xff]
  %v78 = vld [vmem:[%s0 + $0x1d0] sm:$0xff]
  %v79 = vld [vmem:[%s0 + $0x1d8] sm:$0xff]
  %v80 = vld [vmem:[%s0 + $0x1e0] sm:$0xff]
  %v81 = vld [vmem:[%s0 + $0x1e8] sm:$0xff]
  %v82 = vld [vmem:[%s0 + $0x1f0] sm:$0xff]
  %v83 = vld [vmem:[%s0 + $0x1f8] sm:$0xff]
  %v84 = vld [vmem:[%s0 + $0x200] sm:$0xff]
  %v85 = vld [vmem:[%s0 + $0x208] sm:$0xff]
  %v86 = vld [vmem:[%s0 + $0x210] sm:$0xff]
  %v87 = vld [vmem:[%s0 + $0x218] sm:$0xff]
  %v88 = vld [vmem:[%s0 + $0x220] sm:$0xff]
  %v89 = vld [vmem:[%s0 + $0x228] sm:$0xff]
  %v90 = vld [vmem:[%s0 + $0x230] sm:$0xff]
  %v91 = vld [vmem:[%s0 + $0x238] sm:$0xff]
  %v92 = vld [vmem:[%s0 + $0x240] sm:$0xff]
  %v93 = vld [vmem:[%s0 + $0x248] sm:$0xff]
  %v94 = vld [vmem:[%s0 + $0x250] sm:$0xff]
  %v95 = vld [vmem:[%s0 + $0x258] sm:$0xff]
  %v96 = vld [vmem:[%s0 + $0x260] sm:$0xff]
  %v97 = vld [vmem:[%s0 + $0x268] sm:$0xff]
  %v98 = vld [vmem:[%s0 + $0x270] sm:$0xff]
  %v99 = vld [vmem:[%s0 + $0x278] sm:$0xff]
  %v100 = vld [vmem:[%s0 + $0x280] sm:$0xff]
  %v101 = vld [vmem:[%s0 + $0x288] sm:$0xff]
  %v102 = vld [vmem:[%s0 + $0x290] sm:$0xff]
  %v103 = vld [vmem:[%s0 + $0x298] sm:$0xff]
  %v104 = vld [vmem:[%s0 + $0x2a0] sm:$0xff]
  %v105 = vld [vmem:[%s0 + $0x2a8] sm:$0xff]
  %v106 = vld [vmem:[%s0 + $0x2b0] sm:$0xff]
  %v107 = vld [vmem:[%s0 + $0x2b8] sm:$0xff]
  %v108 = vld [vmem:[%s0 + $0x2c0] sm:$0xff]
  %v109 = vld [vmem:[%s0 + $0x2c8] sm:$0xff]
  %v110 = vld [vmem:[%s0 + $0x2d0] sm:$0xff]
  %v111 = vld [vmem:[%s0 + $0x2d8] sm:$0xff]
  %v112 = vld [vmem:[%s0 + $0x2e0] sm:$0xff]
  %v113 = vld [vmem:[%s0 + $0x2e8] sm:$0xff]
  %v114 = vld [vmem:[%s0 + $0x2f0] sm:$0xff]
  %v115 = vld [vmem:[%s0 + $0x2f8] sm:$0xff]
  %v116 = vld [vmem:[%s0 + $0x300] sm:$0xff]
  %v117 = vld [vmem:[%s0 + $0x308] sm:$0xff]
  %v118 = vld [vmem:[%s0 + $0x310] sm:$0xff]
  %v119 = vld [vmem:[%s0 + $0x318] sm:$0xff]
  %v120 = vld [vmem:[%s0 + $0x320] sm:$0xff]
  %v121 = vld [vmem:[%s0 + $0x328] sm:$0xff]
  %v122 = vld [vmem:[%s0 + $0x330] sm:$0xff]
  %v123 = vld [vmem:[%s0 + $0x338] sm:$0xff]
  %v124 = vld [vmem:[%s0 + $0x340] sm:$0xff]
  %v125 = vld [vmem:[%s0 + $0x348] sm:$0xff]
  %v126 = vld [vmem:[%s0 + $0x350] sm:$0xff]
  %v127 = vld [vmem:[%s0 + $0x358] sm:$0xff]
  %v128 = vld [vmem:[%s0 + $0x360] sm:$0xff]
  %v129 = vld [vmem:[%s0 + $0x368] sm:$0xff]
  %v130 = vld [vmem:[%s0 + $0x370] sm:$0xff]
  %v131 = vld [vmem:[%s0 + $0x378] sm:$0xff]
  %v132 = vld [vmem:[%s0 + $0x380] sm:$0xff]
  %v133 = vld [vmem:[%s0 + $0x388] sm:$0xff]
  %v134 = vld [vmem:[%s0 + $0x390] sm:$0xff]
  %v135 = vld [vmem:[%s0 + $0x398] sm:$0xff]
  %v136 = vld [vmem:[%s0 + $0x3a0] sm:$0xff]
  %v137 = vld [vmem:[%s0 + $0x3a8] sm:$0xff]
  %v138 = vld [vmem:[%s0 + $0x3b0] sm:$0xff]
  %v139 = vld [vmem:[%s0 + $0x3b8] sm:$0xff]
  %v140 = vld [vmem:[%s0 + $0x3c0] sm:$0x7]
  %v141 = vld [vmem:[%s0 + $0x3c8] sm:$0x7]
  %v142 = vld [vmem:[%s1] sm:$0xff]
  %v143 = vld [vmem:[%s1 + $0x8] sm:$0xff]
  %v144 = vld [vmem:[%s1 + $0x10] sm:$0xff]
  %v145 = vld [vmem:[%s1 + $0x18] sm:$0xff]
  %v146 = vld [vmem:[%s1 + $0x20] sm:$0xff]
  %v147 = vld [vmem:[%s1 + $0x28] sm:$0xff]
  %v148 = vld [vmem:[%s1 + $0x30] sm:$0xff]
  %v149 = vld [vmem:[%s1 + $0x38] sm:$0xff]
  %v150 = vld [vmem:[%s1 + $0x40] sm:$0xff]
  %v151 = vld [vmem:[%s1 + $0x48] sm:$0xff]
  %v152 = vld [vmem:[%s1 + $0x50] sm:$0xff]
  %v153 = vld [vmem:[%s1 + $0x58] sm:$0xff]
  %v154 = vld [vmem:[%s1 + $0x60] sm:$0xff]
  %v155 = vld [vmem:[%s1 + $0x68] sm:$0xff]
  %v156 = vld [vmem:[%s1 + $0x70] sm:$0xff]
  %v157 = vld [vmem:[%s1 + $0x78] sm:$0xff]
  %v158 = vld [vmem:[%s1 + $0x80] sm:$0x7f]
  %v159 = vld [vmem:[%s2] sm:$0x1]
  %v161 = vperm.slane %v159, 0
  %vm163 = vcmask 56320
  %v165 = vsel %vm163, %v21, 0
  %v168 = vsel %vm163, %v23, 0
  %v171 = vsel %vm163, %v25, 0
  %v174 = vsel %vm163, %v27, 0
  %v177 = vsel %vm163, %v29, 0
  %v180 = vsel %vm163, %v31, 0
  %v183 = vsel %vm163, %v33, 0
  %v186 = vsel %vm163, %v35, 0
  %v189 = vsel %vm163, %v37, 0
  %v192 = vsel %vm163, %v39, 0
  %v195 = vsel %vm163, %v41, 0
  %v198 = vsel %vm163, %v43, 0
  %v201 = vsel %vm163, %v45, 0
  %v204 = vsel %vm163, %v47, 0
  %v207 = vsel %vm163, %v49, 0
  %v210 = vsel %vm163, %v51, 0
  %v213 = vsel %vm163, %v53, 0
  %v216 = vsel %vm163, %v55, 0
  %v219 = vsel %vm163, %v57, 0
  %v222 = vsel %vm163, %v59, 0
  %v225 = vsel %vm163, %v61, 0
  %v228 = vsel %vm163, %v63, 0
  %v231 = vsel %vm163, %v65, 0
  %v234 = vsel %vm163, %v67, 0
  %v237 = vsel %vm163, %v69, 0
  %v240 = vsel %vm163, %v71, 0
  %v243 = vsel %vm163, %v73, 0
  %v246 = vsel %vm163, %v75, 0
  %v249 = vsel %vm163, %v77, 0
  %v252 = vsel %vm163, %v79, 0
  %v255 = vsel %vm163, %v81, 0
  %v258 = vsel %vm163, %v83, 0
  %v261 = vsel %vm163, %v85, 0
  %v264 = vsel %vm163, %v87, 0
  %v267 = vsel %vm163, %v89, 0
  %v270 = vsel %vm163, %v91, 0
  %v273 = vsel %vm163, %v93, 0
  %v276 = vsel %vm163, %v95, 0
  %v279 = vsel %vm163, %v97, 0
  %v282 = vsel %vm163, %v99, 0
  %v285 = vsel %vm163, %v101, 0
  %v288 = vsel %vm163, %v103, 0
  %v291 = vsel %vm163, %v105, 0
  %v294 = vsel %vm163, %v107, 0
  %v297 = vsel %vm163, %v109, 0
  %v300 = vsel %vm163, %v111, 0
  %v303 = vsel %vm163, %v113, 0
  %v306 = vsel %vm163, %v115, 0
  %v309 = vsel %vm163, %v117, 0
  %v312 = vsel %vm163, %v119, 0
  %v315 = vsel %vm163, %v121, 0
  %v318 = vsel %vm163, %v123, 0
  %v321 = vsel %vm163, %v125, 0
  %v324 = vsel %vm163, %v127, 0
  %v327 = vsel %vm163, %v129, 0
  %v330 = vsel %vm163, %v131, 0
  %v333 = vsel %vm163, %v133, 0
  %v336 = vsel %vm163, %v135, 0
  %v339 = vsel %vm163, %v137, 0
  %v342 = vsel %vm163, %v139, 0
  %v345 = vsel %vm163, %v141, 0
  %vm347 = vcmask 1046528
  %v349 = vsel %vm347, %v158, 0
  %351 = vmatpush.msra.mxu0 %v157
  %352 = vmatpush.msra.mxu0 %v156
  %353 = vmatpush.msra.mxu0 %v155
  %354 = vmatpush.msra.mxu0 %v154
  %355 = vmatpush.msra.mxu0 %v153
  %356 = vmatpush.msra.mxu0 %v152
  %357 = vmatpush.msra.mxu0 %v151
  %358 = vmatpush.msra.mxu0 %v150
  %359 = vmatpush.msra.mxu0 %v149
  %360 = vmatpush.msra.mxu0 %v148
  %361 = vmatpush.msra.mxu0 %v147
  %362 = vmatpush.msra.mxu0 %v146
  %363 = vmatpush.msra.mxu0 %v145
  %364 = vmatpush.msra.mxu0 %v144
  %365 = vmatpush.msra.mxu0 %v143
  %366 = vmatpush.msra.mxu0 %v142
  %367 = vmatmul.f32.gmra.mxu0 %v20
  %v368 = vpop.f32.mrf.mxu0
  %v369 = vadd.f32 %v161, %v368
  %370 = vmatmul.f32.gmra.mxu0 %v22
  %v371 = vpop.f32.mrf.mxu0
  %v372 = vadd.f32 %v161, %v371
  %373 = vmatmul.f32.gmra.mxu0 %v24
  %v374 = vpop.f32.mrf.mxu0
  %v375 = vadd.f32 %v161, %v374
  %376 = vmatmul.f32.gmra.mxu0 %v26
  %v377 = vpop.f32.mrf.mxu0
  %v378 = vadd.f32 %v161, %v377
  %379 = vmatmul.f32.gmra.mxu0 %v28
  %v380 = vpop.f32.mrf.mxu0
  %v381 = vadd.f32 %v161, %v380
  %382 = vmatmul.f32.gmra.mxu0 %v30
  %v383 = vpop.f32.mrf.mxu0
  %v384 = vadd.f32 %v161, %v383
  %385 = vmatmul.f32.gmra.mxu0 %v32
  %v386 = vpop.f32.mrf.mxu0
  %v387 = vadd.f32 %v161, %v386
  %388 = vmatmul.f32.gmra.mxu0 %v34
  %v389 = vpop.f32.mrf.mxu0
  %v390 = vadd.f32 %v161, %v389
  %391 = vmatmul.f32.gmra.mxu0 %v36
  %v392 = vpop.f32.mrf.mxu0
  %v393 = vadd.f32 %v161, %v392
  %394 = vmatmul.f32.gmra.mxu0 %v38
  %v395 = vpop.f32.mrf.mxu0
  %v396 = vadd.f32 %v161, %v395
  %397 = vmatmul.f32.gmra.mxu0 %v40
  %v398 = vpop.f32.mrf.mxu0
  %v399 = vadd.f32 %v161, %v398
  %400 = vmatmul.f32.gmra.mxu0 %v42
  %v401 = vpop.f32.mrf.mxu0
  %v402 = vadd.f32 %v161, %v401
  %403 = vmatmul.f32.gmra.mxu0 %v44
  %v404 = vpop.f32.mrf.mxu0
  %v405 = vadd.f32 %v161, %v404
  %406 = vmatmul.f32.gmra.mxu0 %v46
  %v407 = vpop.f32.mrf.mxu0
  %v408 = vadd.f32 %v161, %v407
  %409 = vmatmul.f32.gmra.mxu0 %v48
  %v410 = vpop.f32.mrf.mxu0
  %v411 = vadd.f32 %v161, %v410
  %412 = vmatmul.f32.gmra.mxu0 %v50
  %v413 = vpop.f32.mrf.mxu0
  %v414 = vadd.f32 %v161, %v413
  %415 = vmatmul.f32.gmra.mxu0 %v52
  %v416 = vpop.f32.mrf.mxu0
  %v417 = vadd.f32 %v161, %v416
  %418 = vmatmul.f32.gmra.mxu0 %v54
  %v419 = vpop.f32.mrf.mxu0
  %v420 = vadd.f32 %v161, %v419
  %421 = vmatmul.f32.gmra.mxu0 %v56
  %v422 = vpop.f32.mrf.mxu0
  %v423 = vadd.f32 %v161, %v422
  %424 = vmatmul.f32.gmra.mxu0 %v58
  %v425 = vpop.f32.mrf.mxu0
  %v426 = vadd.f32 %v161, %v425
  %427 = vmatmul.f32.gmra.mxu0 %v60
  %v428 = vpop.f32.mrf.mxu0
  %v429 = vadd.f32 %v161, %v428
  %430 = vmatmul.f32.gmra.mxu0 %v62
  %v431 = vpop.f32.mrf.mxu0
  %v432 = vadd.f32 %v161, %v431
  %433 = vmatmul.f32.gmra.mxu0 %v64
  %v434 = vpop.f32.mrf.mxu0
  %v435 = vadd.f32 %v161, %v434
  %436 = vmatmul.f32.gmra.mxu0 %v66
  %v437 = vpop.f32.mrf.mxu0
  %v438 = vadd.f32 %v161, %v437
  %439 = vmatmul.f32.gmra.mxu0 %v68
  %v440 = vpop.f32.mrf.mxu0
  %v441 = vadd.f32 %v161, %v440
  %442 = vmatmul.f32.gmra.mxu0 %v70
  %v443 = vpop.f32.mrf.mxu0
  %v444 = vadd.f32 %v161, %v443
  %445 = vmatmul.f32.gmra.mxu0 %v72
  %v446 = vpop.f32.mrf.mxu0
  %v447 = vadd.f32 %v161, %v446
  %448 = vmatmul.f32.gmra.mxu0 %v74
  %v449 = vpop.f32.mrf.mxu0
  %v450 = vadd.f32 %v161, %v449
  %451 = vmatmul.f32.gmra.mxu0 %v76
  %v452 = vpop.f32.mrf.mxu0
  %v453 = vadd.f32 %v161, %v452
  %454 = vmatmul.f32.gmra.mxu0 %v78
  %v455 = vpop.f32.mrf.mxu0
  %v456 = vadd.f32 %v161, %v455
  %457 = vmatmul.f32.gmra.mxu0 %v80
  %v458 = vpop.f32.mrf.mxu0
  %v459 = vadd.f32 %v161, %v458
  %460 = vmatmul.f32.gmra.mxu0 %v82
  %v461 = vpop.f32.mrf.mxu0
  %v462 = vadd.f32 %v161, %v461
  %463 = vmatmul.f32.gmra.mxu0 %v84
  %v464 = vpop.f32.mrf.mxu0
  %v465 = vadd.f32 %v161, %v464
  %466 = vmatmul.f32.gmra.mxu0 %v86
  %v467 = vpop.f32.mrf.mxu0
  %v468 = vadd.f32 %v161, %v467
  %469 = vmatmul.f32.gmra.mxu0 %v88
  %v470 = vpop.f32.mrf.mxu0
  %v471 = vadd.f32 %v161, %v470
  %472 = vmatmul.f32.gmra.mxu0 %v90
  %v473 = vpop.f32.mrf.mxu0
  %v474 = vadd.f32 %v161, %v473
  %475 = vmatmul.f32.gmra.mxu0 %v92
  %v476 = vpop.f32.mrf.mxu0
  %v477 = vadd.f32 %v161, %v476
  %478 = vmatmul.f32.gmra.mxu0 %v94
  %v479 = vpop.f32.mrf.mxu0
  %v480 = vadd.f32 %v161, %v479
  %481 = vmatmul.f32.gmra.mxu0 %v96
  %v482 = vpop.f32.mrf.mxu0
  %v483 = vadd.f32 %v161, %v482
  %484 = vmatmul.f32.gmra.mxu0 %v98
  %v485 = vpop.f32.mrf.mxu0
  %v486 = vadd.f32 %v161, %v485
  %487 = vmatmul.f32.gmra.mxu0 %v100
  %v488 = vpop.f32.mrf.mxu0
  %v489 = vadd.f32 %v161, %v488
  %490 = vmatmul.f32.gmra.mxu0 %v102
  %v491 = vpop.f32.mrf.mxu0
  %v492 = vadd.f32 %v161, %v491
  %493 = vmatmul.f32.gmra.mxu0 %v104
  %v494 = vpop.f32.mrf.mxu0
  %v495 = vadd.f32 %v161, %v494
  %496 = vmatmul.f32.gmra.mxu0 %v106
  %v497 = vpop.f32.mrf.mxu0
  %v498 = vadd.f32 %v161, %v497
  %499 = vmatmul.f32.gmra.mxu0 %v108
  %v500 = vpop.f32.mrf.mxu0
  %v501 = vadd.f32 %v161, %v500
  %502 = vmatmul.f32.gmra.mxu0 %v110
  %v503 = vpop.f32.mrf.mxu0
  %v504 = vadd.f32 %v161, %v503
  %505 = vmatmul.f32.gmra.mxu0 %v112
  %v506 = vpop.f32.mrf.mxu0
  %v507 = vadd.f32 %v161, %v506
  %508 = vmatmul.f32.gmra.mxu0 %v114
  %v509 = vpop.f32.mrf.mxu0
  %v510 = vadd.f32 %v161, %v509
  %511 = vmatmul.f32.gmra.mxu0 %v116
  %v512 = vpop.f32.mrf.mxu0
  %v513 = vadd.f32 %v161, %v512
  %514 = vmatmul.f32.gmra.mxu0 %v118
  %v515 = vpop.f32.mrf.mxu0
  %v516 = vadd.f32 %v161, %v515
  %517 = vmatmul.f32.gmra.mxu0 %v120
  %v518 = vpop.f32.mrf.mxu0
  %v519 = vadd.f32 %v161, %v518
  %520 = vmatmul.f32.gmra.mxu0 %v122
  %v521 = vpop.f32.mrf.mxu0
  %v522 = vadd.f32 %v161, %v521
  %523 = vmatmul.f32.gmra.mxu0 %v124
  %v524 = vpop.f32.mrf.mxu0
  %v525 = vadd.f32 %v161, %v524
  %526 = vmatmul.f32.gmra.mxu0 %v126
  %v527 = vpop.f32.mrf.mxu0
  %v528 = vadd.f32 %v161, %v527
  %529 = vmatmul.f32.gmra.mxu0 %v128
  %v530 = vpop.f32.mrf.mxu0
  %v531 = vadd.f32 %v161, %v530
  %532 = vmatmul.f32.gmra.mxu0 %v130
  %v533 = vpop.f32.mrf.mxu0
  %v534 = vadd.f32 %v161, %v533
  %535 = vmatmul.f32.gmra.mxu0 %v132
  %v536 = vpop.f32.mrf.mxu0
  %v537 = vadd.f32 %v161, %v536
  %538 = vmatmul.f32.gmra.mxu0 %v134
  %v539 = vpop.f32.mrf.mxu0
  %v540 = vadd.f32 %v161, %v539
  %541 = vmatmul.f32.gmra.mxu0 %v136
  %v542 = vpop.f32.mrf.mxu0
  %v543 = vadd.f32 %v161, %v542
  %544 = vmatmul.f32.gmra.mxu0 %v138
  %v545 = vpop.f32.mrf.mxu0
  %v546 = vadd.f32 %v161, %v545
  %547 = vmatmul.f32.gmra.mxu0 %v140
  %v548 = vpop.f32.mrf.mxu0
  %v549 = vadd.f32 %v161, %v548
  %550 = vdwg.mxu0
  %551 = vmatpush.msra.mxu0 0.0
  %552 = vmatpush.msra.mxu0 0.0
  %553 = vmatpush.msra.mxu0 0.0
  %554 = vmatpush.msra.mxu0 0.0
  %555 = vmatpush.msra.mxu0 0.0
  %556 = vmatpush.msra.mxu0 0.0
  %557 = vmatpush.msra.mxu0 0.0
  %558 = vmatpush.msra.mxu0 0.0
  %559 = vmatpush.msra.mxu0 0.0
  %560 = vmatpush.msra.mxu0 0.0
  %561 = vmatpush.msra.mxu0 0.0
  %562 = vmatpush.msra.mxu0 0.0
  %563 = vmatpush.msra.mxu0 0.0
  %564 = vmatpush.msra.mxu0 0.0
  %565 = vmatpush.msra.mxu0 0.0
  %566 = vmatpush.msra.mxu0 %v349
  %567 = vmatmul.f32.gmra.mxu0 %v165
  %v568 = vpop.f32.mrf.mxu0
  %v569 = vadd.f32 %v369, %v568
  %570 = vmatmul.f32.gmra.mxu0 %v168
  %v571 = vpop.f32.mrf.mxu0
  %v572 = vadd.f32 %v372, %v571
  %573 = vmatmul.f32.gmra.mxu0 %v171
  %v574 = vpop.f32.mrf.mxu0
  %v575 = vadd.f32 %v375, %v574
  %576 = vmatmul.f32.gmra.mxu0 %v174
  %v577 = vpop.f32.mrf.mxu0
  %v578 = vadd.f32 %v378, %v577
  %579 = vmatmul.f32.gmra.mxu0 %v177
  %v580 = vpop.f32.mrf.mxu0
  %v581 = vadd.f32 %v381, %v580
  %582 = vmatmul.f32.gmra.mxu0 %v180
  %v583 = vpop.f32.mrf.mxu0
  %v584 = vadd.f32 %v384, %v583
  %585 = vmatmul.f32.gmra.mxu0 %v183
  %v586 = vpop.f32.mrf.mxu0
  %v587 = vadd.f32 %v387, %v586
  %588 = vmatmul.f32.gmra.mxu0 %v186
  %v589 = vpop.f32.mrf.mxu0
  %v590 = vadd.f32 %v390, %v589
  %591 = vmatmul.f32.gmra.mxu0 %v189
  %v592 = vpop.f32.mrf.mxu0
  %v593 = vadd.f32 %v393, %v592
  %594 = vmatmul.f32.gmra.mxu0 %v192
  %v595 = vpop.f32.mrf.mxu0
  %v596 = vadd.f32 %v396, %v595
  %597 = vmatmul.f32.gmra.mxu0 %v195
  %v598 = vpop.f32.mrf.mxu0
  %v599 = vadd.f32 %v399, %v598
  %600 = vmatmul.f32.gmra.mxu0 %v198
  %v601 = vpop.f32.mrf.mxu0
  %v602 = vadd.f32 %v402, %v601
  %603 = vmatmul.f32.gmra.mxu0 %v201
  %v604 = vpop.f32.mrf.mxu0
  %v605 = vadd.f32 %v405, %v604
  %606 = vmatmul.f32.gmra.mxu0 %v204
  %v607 = vpop.f32.mrf.mxu0
  %v608 = vadd.f32 %v408, %v607
  %609 = vmatmul.f32.gmra.mxu0 %v207
  %v610 = vpop.f32.mrf.mxu0
  %v611 = vadd.f32 %v411, %v610
  %612 = vmatmul.f32.gmra.mxu0 %v210
  %v613 = vpop.f32.mrf.mxu0
  %v614 = vadd.f32 %v414, %v613
  %615 = vmatmul.f32.gmra.mxu0 %v213
  %v616 = vpop.f32.mrf.mxu0
  %v617 = vadd.f32 %v417, %v616
  %618 = vmatmul.f32.gmra.mxu0 %v216
  %v619 = vpop.f32.mrf.mxu0
  %v620 = vadd.f32 %v420, %v619
  %621 = vmatmul.f32.gmra.mxu0 %v219
  %v622 = vpop.f32.mrf.mxu0
  %v623 = vadd.f32 %v423, %v622
  %624 = vmatmul.f32.gmra.mxu0 %v222
  %v625 = vpop.f32.mrf.mxu0
  %v626 = vadd.f32 %v426, %v625
  %627 = vmatmul.f32.gmra.mxu0 %v225
  %v628 = vpop.f32.mrf.mxu0
  %v629 = vadd.f32 %v429, %v628
  %630 = vmatmul.f32.gmra.mxu0 %v228
  %v631 = vpop.f32.mrf.mxu0
  %v632 = vadd.f32 %v432, %v631
  %633 = vmatmul.f32.gmra.mxu0 %v231
  %v634 = vpop.f32.mrf.mxu0
  %v635 = vadd.f32 %v435, %v634
  %636 = vmatmul.f32.gmra.mxu0 %v234
  %v637 = vpop.f32.mrf.mxu0
  %v638 = vadd.f32 %v438, %v637
  %639 = vmatmul.f32.gmra.mxu0 %v237
  %v640 = vpop.f32.mrf.mxu0
  %v641 = vadd.f32 %v441, %v640
  %642 = vmatmul.f32.gmra.mxu0 %v240
  %v643 = vpop.f32.mrf.mxu0
  %v644 = vadd.f32 %v444, %v643
  %645 = vmatmul.f32.gmra.mxu0 %v243
  %v646 = vpop.f32.mrf.mxu0
  %v647 = vadd.f32 %v447, %v646
  %648 = vmatmul.f32.gmra.mxu0 %v246
  %v649 = vpop.f32.mrf.mxu0
  %v650 = vadd.f32 %v450, %v649
  %651 = vmatmul.f32.gmra.mxu0 %v249
  %v652 = vpop.f32.mrf.mxu0
  %v653 = vadd.f32 %v453, %v652
  %654 = vmatmul.f32.gmra.mxu0 %v252
  %v655 = vpop.f32.mrf.mxu0
  %v656 = vadd.f32 %v456, %v655
  %657 = vmatmul.f32.gmra.mxu0 %v255
  %v658 = vpop.f32.mrf.mxu0
  %v659 = vadd.f32 %v459, %v658
  %660 = vmatmul.f32.gmra.mxu0 %v258
  %v661 = vpop.f32.mrf.mxu0
  %v662 = vadd.f32 %v462, %v661
  %663 = vmatmul.f32.gmra.mxu0 %v261
  %v664 = vpop.f32.mrf.mxu0
  %v665 = vadd.f32 %v465, %v664
  %666 = vmatmul.f32.gmra.mxu0 %v264
  %v667 = vpop.f32.mrf.mxu0
  %v668 = vadd.f32 %v468, %v667
  %669 = vmatmul.f32.gmra.mxu0 %v267
  %v670 = vpop.f32.mrf.mxu0
  %v671 = vadd.f32 %v471, %v670
  %672 = vmatmul.f32.gmra.mxu0 %v270
  %v673 = vpop.f32.mrf.mxu0
  %v674 = vadd.f32 %v474, %v673
  %675 = vmatmul.f32.gmra.mxu0 %v273
  %v676 = vpop.f32.mrf.mxu0
  %v677 = vadd.f32 %v477, %v676
  %678 = vmatmul.f32.gmra.mxu0 %v276
  %v679 = vpop.f32.mrf.mxu0
  %v680 = vadd.f32 %v480, %v679
  %681 = vmatmul.f32.gmra.mxu0 %v279
  %v682 = vpop.f32.mrf.mxu0
  %v683 = vadd.f32 %v483, %v682
  %684 = vmatmul.f32.gmra.mxu0 %v282
  %v685 = vpop.f32.mrf.mxu0
  %v686 = vadd.f32 %v486, %v685
  %687 = vmatmul.f32.gmra.mxu0 %v285
  %v688 = vpop.f32.mrf.mxu0
  %v689 = vadd.f32 %v489, %v688
  %690 = vmatmul.f32.gmra.mxu0 %v288
  %v691 = vpop.f32.mrf.mxu0
  %v692 = vadd.f32 %v492, %v691
  %693 = vmatmul.f32.gmra.mxu0 %v291
  %v694 = vpop.f32.mrf.mxu0
  %v695 = vadd.f32 %v495, %v694
  %696 = vmatmul.f32.gmra.mxu0 %v294
  %v697 = vpop.f32.mrf.mxu0
  %v698 = vadd.f32 %v498, %v697
  %699 = vmatmul.f32.gmra.mxu0 %v297
  %v700 = vpop.f32.mrf.mxu0
  %v701 = vadd.f32 %v501, %v700
  %702 = vmatmul.f32.gmra.mxu0 %v300
  %v703 = vpop.f32.mrf.mxu0
  %v704 = vadd.f32 %v504, %v703
  %705 = vmatmul.f32.gmra.mxu0 %v303
  %v706 = vpop.f32.mrf.mxu0
  %v707 = vadd.f32 %v507, %v706
  %708 = vmatmul.f32.gmra.mxu0 %v306
  %v709 = vpop.f32.mrf.mxu0
  %v710 = vadd.f32 %v510, %v709
  %711 = vmatmul.f32.gmra.mxu0 %v309
  %v712 = vpop.f32.mrf.mxu0
  %v713 = vadd.f32 %v513, %v712
  %714 = vmatmul.f32.gmra.mxu0 %v312
  %v715 = vpop.f32.mrf.mxu0
  %v716 = vadd.f32 %v516, %v715
  %717 = vmatmul.f32.gmra.mxu0 %v315
  %v718 = vpop.f32.mrf.mxu0
  %v719 = vadd.f32 %v519, %v718
  %720 = vmatmul.f32.gmra.mxu0 %v318
  %v721 = vpop.f32.mrf.mxu0
  %v722 = vadd.f32 %v522, %v721
  %723 = vmatmul.f32.gmra.mxu0 %v321
  %v724 = vpop.f32.mrf.mxu0
  %v725 = vadd.f32 %v525, %v724
  %726 = vmatmul.f32.gmra.mxu0 %v324
  %v727 = vpop.f32.mrf.mxu0
  %v728 = vadd.f32 %v528, %v727
  %729 = vmatmul.f32.gmra.mxu0 %v327
  %v730 = vpop.f32.mrf.mxu0
  %v731 = vadd.f32 %v531, %v730
  %732 = vmatmul.f32.gmra.mxu0 %v330
  %v733 = vpop.f32.mrf.mxu0
  %v734 = vadd.f32 %v534, %v733
  %735 = vmatmul.f32.gmra.mxu0 %v333
  %v736 = vpop.f32.mrf.mxu0
  %v737 = vadd.f32 %v537, %v736
  %738 = vmatmul.f32.gmra.mxu0 %v336
  %v739 = vpop.f32.mrf.mxu0
  %v740 = vadd.f32 %v540, %v739
  %741 = vmatmul.f32.gmra.mxu0 %v339
  %v742 = vpop.f32.mrf.mxu0
  %v743 = vadd.f32 %v543, %v742
  %744 = vmatmul.f32.gmra.mxu0 %v342
  %v745 = vpop.f32.mrf.mxu0
  %v746 = vadd.f32 %v546, %v745
  %747 = vmatmul.f32.gmra.mxu0 %v345
  %v748 = vpop.f32.mrf.mxu0
  %v749 = vadd.f32 %v549, %v748
  %750 = vdwg.mxu0
  %v751 = vld [vmem:[%s3] sm:$0xff]
  %v752 = vld [vmem:[%s3 + $0x8] sm:$0xff]
  %v753 = vld [vmem:[%s4] sm:$0x1]
  %v755 = vperm.slane %v753, 0
  %vm757 = vcmask 130048
  %v759 = vsel %vm757, %v569, 0
  %v762 = vsel %vm757, %v572, 0
  %v765 = vsel %vm757, %v575, 0
  %v768 = vsel %vm757, %v578, 0
  %v771 = vsel %vm757, %v581, 0
  %v774 = vsel %vm757, %v584, 0
  %v777 = vsel %vm757, %v587, 0
  %v780 = vsel %vm757, %v590, 0
  %v783 = vsel %vm757, %v593, 0
  %v786 = vsel %vm757, %v596, 0
  %v789 = vsel %vm757, %v599, 0
  %v792 = vsel %vm757, %v602, 0
  %v795 = vsel %vm757, %v605, 0
  %v798 = vsel %vm757, %v608, 0
  %v801 = vsel %vm757, %v611, 0
  %v804 = vsel %vm757, %v614, 0
  %v807 = vsel %vm757, %v617, 0
  %v810 = vsel %vm757, %v620, 0
  %v813 = vsel %vm757, %v623, 0
  %v816 = vsel %vm757, %v626, 0
  %v819 = vsel %vm757, %v629, 0
  %v822 = vsel %vm757, %v632, 0
  %v825 = vsel %vm757, %v635, 0
  %v828 = vsel %vm757, %v638, 0
  %v831 = vsel %vm757, %v641, 0
  %v834 = vsel %vm757, %v644, 0
  %v837 = vsel %vm757, %v647, 0
  %v840 = vsel %vm757, %v650, 0
  %v843 = vsel %vm757, %v653, 0
  %v846 = vsel %vm757, %v656, 0
  %v849 = vsel %vm757, %v659, 0
  %v852 = vsel %vm757, %v662, 0
  %v855 = vsel %vm757, %v665, 0
  %v858 = vsel %vm757, %v668, 0
  %v861 = vsel %vm757, %v671, 0
  %v864 = vsel %vm757, %v674, 0
  %v867 = vsel %vm757, %v677, 0
  %v870 = vsel %vm757, %v680, 0
  %v873 = vsel %vm757, %v683, 0
  %v876 = vsel %vm757, %v686, 0
  %v879 = vsel %vm757, %v689, 0
  %v882 = vsel %vm757, %v692, 0
  %v885 = vsel %vm757, %v695, 0
  %v888 = vsel %vm757, %v698, 0
  %v891 = vsel %vm757, %v701, 0
  %v894 = vsel %vm757, %v704, 0
  %v897 = vsel %vm757, %v707, 0
  %v900 = vsel %vm757, %v710, 0
  %v903 = vsel %vm757, %v713, 0
  %v906 = vsel %vm757, %v716, 0
  %v909 = vsel %vm757, %v719, 0
  %v912 = vsel %vm757, %v722, 0
  %v915 = vsel %vm757, %v725, 0
  %v918 = vsel %vm757, %v728, 0
  %v921 = vsel %vm757, %v731, 0
  %v924 = vsel %vm757, %v734, 0
  %v927 = vsel %vm757, %v737, 0
  %v930 = vsel %vm757, %v740, 0
  %v933 = vsel %vm757, %v743, 0
  %v936 = vsel %vm757, %v746, 0
  %v939 = vsel %vm757, %v749, 0
  %941 = vmatpush.msra.mxu0 0.0
  %942 = vmatpush.msra.mxu0 0.0
  %943 = vmatpush.msra.mxu0 0.0
  %944 = vmatpush.msra.mxu0 0.0
  %945 = vmatpush.msra.mxu0 0.0
  %946 = vmatpush.msra.mxu0 0.0
  %947 = vmatpush.msra.mxu0 0.0
  %948 = vmatpush.msra.mxu0 0.0
  %949 = vmatpush.msra.mxu0 0.0
  %950 = vmatpush.msra.mxu0 0.0
  %951 = vmatpush.msra.mxu0 0.0
  %952 = vmatpush.msra.mxu0 0.0
  %953 = vmatpush.msra.mxu0 0.0
  %954 = vmatpush.msra.mxu0 0.0
  %955 = vmatpush.msra.mxu0 %v752
  %956 = vmatpush.msra.mxu0 %v751
  %957 = vmatmul.f32.gmra.mxu0 %v759
  %v958 = vpop.f32.mrf.mxu0
  %v959 = vadd.f32 %v755, %v958
  %960 = vmatmul.f32.gmra.mxu0 %v762
  %v961 = vpop.f32.mrf.mxu0
  %v962 = vadd.f32 %v755, %v961
  %963 = vmatmul.f32.gmra.mxu0 %v765
  %v964 = vpop.f32.mrf.mxu0
  %v965 = vadd.f32 %v755, %v964
  %966 = vmatmul.f32.gmra.mxu0 %v768
  %v967 = vpop.f32.mrf.mxu0
  %v968 = vadd.f32 %v755, %v967
  %969 = vmatmul.f32.gmra.mxu0 %v771
  %v970 = vpop.f32.mrf.mxu0
  %v971 = vadd.f32 %v755, %v970
  %972 = vmatmul.f32.gmra.mxu0 %v774
  %v973 = vpop.f32.mrf.mxu0
  %v974 = vadd.f32 %v755, %v973
  %975 = vmatmul.f32.gmra.mxu0 %v777
  %v976 = vpop.f32.mrf.mxu0
  %v977 = vadd.f32 %v755, %v976
  %978 = vmatmul.f32.gmra.mxu0 %v780
  %v979 = vpop.f32.mrf.mxu0
  %v980 = vadd.f32 %v755, %v979
  %981 = vmatmul.f32.gmra.mxu0 %v783
  %v982 = vpop.f32.mrf.mxu0
  %v983 = vadd.f32 %v755, %v982
  %984 = vmatmul.f32.gmra.mxu0 %v786
  %v985 = vpop.f32.mrf.mxu0
  %v986 = vadd.f32 %v755, %v985
  %987 = vmatmul.f32.gmra.mxu0 %v789
  %v988 = vpop.f32.mrf.mxu0
  %v989 = vadd.f32 %v755, %v988
  %990 = vmatmul.f32.gmra.mxu0 %v792
  %v991 = vpop.f32.mrf.mxu0
  %v992 = vadd.f32 %v755, %v991
  %993 = vmatmul.f32.gmra.mxu0 %v795
  %v994 = vpop.f32.mrf.mxu0
  %v995 = vadd.f32 %v755, %v994
  %996 = vmatmul.f32.gmra.mxu0 %v798
  %v997 = vpop.f32.mrf.mxu0
  %v998 = vadd.f32 %v755, %v997
  %999 = vmatmul.f32.gmra.mxu0 %v801
  %v1000 = vpop.f32.mrf.mxu0
  %v1001 = vadd.f32 %v755, %v1000
  %1002 = vmatmul.f32.gmra.mxu0 %v804
  %v1003 = vpop.f32.mrf.mxu0
  %v1004 = vadd.f32 %v755, %v1003
  %1005 = vmatmul.f32.gmra.mxu0 %v807
  %v1006 = vpop.f32.mrf.mxu0
  %v1007 = vadd.f32 %v755, %v1006
  %1008 = vmatmul.f32.gmra.mxu0 %v810
  %v1009 = vpop.f32.mrf.mxu0
  %v1010 = vadd.f32 %v755, %v1009
  %1011 = vmatmul.f32.gmra.mxu0 %v813
  %v1012 = vpop.f32.mrf.mxu0
  %v1013 = vadd.f32 %v755, %v1012
  %1014 = vmatmul.f32.gmra.mxu0 %v816
  %v1015 = vpop.f32.mrf.mxu0
  %v1016 = vadd.f32 %v755, %v1015
  %1017 = vmatmul.f32.gmra.mxu0 %v819
  %v1018 = vpop.f32.mrf.mxu0
  %v1019 = vadd.f32 %v755, %v1018
  %1020 = vmatmul.f32.gmra.mxu0 %v822
  %v1021 = vpop.f32.mrf.mxu0
  %v1022 = vadd.f32 %v755, %v1021
  %1023 = vmatmul.f32.gmra.mxu0 %v825
  %v1024 = vpop.f32.mrf.mxu0
  %v1025 = vadd.f32 %v755, %v1024
  %1026 = vmatmul.f32.gmra.mxu0 %v828
  %v1027 = vpop.f32.mrf.mxu0
  %v1028 = vadd.f32 %v755, %v1027
  %1029 = vmatmul.f32.gmra.mxu0 %v831
  %v1030 = vpop.f32.mrf.mxu0
  %v1031 = vadd.f32 %v755, %v1030
  %1032 = vmatmul.f32.gmra.mxu0 %v834
  %v1033 = vpop.f32.mrf.mxu0
  %v1034 = vadd.f32 %v755, %v1033
  %1035 = vmatmul.f32.gmra.mxu0 %v837
  %v1036 = vpop.f32.mrf.mxu0
  %v1037 = vadd.f32 %v755, %v1036
  %1038 = vmatmul.f32.gmra.mxu0 %v840
  %v1039 = vpop.f32.mrf.mxu0
  %v1040 = vadd.f32 %v755, %v1039
  %1041 = vmatmul.f32.gmra.mxu0 %v843
  %v1042 = vpop.f32.mrf.mxu0
  %v1043 = vadd.f32 %v755, %v1042
  %1044 = vmatmul.f32.gmra.mxu0 %v846
  %v1045 = vpop.f32.mrf.mxu0
  %v1046 = vadd.f32 %v755, %v1045
  %1047 = vmatmul.f32.gmra.mxu0 %v849
  %v1048 = vpop.f32.mrf.mxu0
  %v1049 = vadd.f32 %v755, %v1048
  %1050 = vmatmul.f32.gmra.mxu0 %v852
  %v1051 = vpop.f32.mrf.mxu0
  %v1052 = vadd.f32 %v755, %v1051
  %1053 = vmatmul.f32.gmra.mxu0 %v855
  %v1054 = vpop.f32.mrf.mxu0
  %v1055 = vadd.f32 %v755, %v1054
  %1056 = vmatmul.f32.gmra.mxu0 %v858
  %v1057 = vpop.f32.mrf.mxu0
  %v1058 = vadd.f32 %v755, %v1057
  %1059 = vmatmul.f32.gmra.mxu0 %v861
  %v1060 = vpop.f32.mrf.mxu0
  %v1061 = vadd.f32 %v755, %v1060
  %1062 = vmatmul.f32.gmra.mxu0 %v864
  %v1063 = vpop.f32.mrf.mxu0
  %v1064 = vadd.f32 %v755, %v1063
  %1065 = vmatmul.f32.gmra.mxu0 %v867
  %v1066 = vpop.f32.mrf.mxu0
  %v1067 = vadd.f32 %v755, %v1066
  %1068 = vmatmul.f32.gmra.mxu0 %v870
  %v1069 = vpop.f32.mrf.mxu0
  %v1070 = vadd.f32 %v755, %v1069
  %1071 = vmatmul.f32.gmra.mxu0 %v873
  %v1072 = vpop.f32.mrf.mxu0
  %v1073 = vadd.f32 %v755, %v1072
  %1074 = vmatmul.f32.gmra.mxu0 %v876
  %v1075 = vpop.f32.mrf.mxu0
  %v1076 = vadd.f32 %v755, %v1075
  %1077 = vmatmul.f32.gmra.mxu0 %v879
  %v1078 = vpop.f32.mrf.mxu0
  %v1079 = vadd.f32 %v755, %v1078
  %1080 = vmatmul.f32.gmra.mxu0 %v882
  %v1081 = vpop.f32.mrf.mxu0
  %v1082 = vadd.f32 %v755, %v1081
  %1083 = vmatmul.f32.gmra.mxu0 %v885
  %v1084 = vpop.f32.mrf.mxu0
  %v1085 = vadd.f32 %v755, %v1084
  %1086 = vmatmul.f32.gmra.mxu0 %v888
  %v1087 = vpop.f32.mrf.mxu0
  %v1088 = vadd.f32 %v755, %v1087
  %1089 = vmatmul.f32.gmra.mxu0 %v891
  %v1090 = vpop.f32.mrf.mxu0
  %v1091 = vadd.f32 %v755, %v1090
  %1092 = vmatmul.f32.gmra.mxu0 %v894
  %v1093 = vpop.f32.mrf.mxu0
  %v1094 = vadd.f32 %v755, %v1093
  %1095 = vmatmul.f32.gmra.mxu0 %v897
  %v1096 = vpop.f32.mrf.mxu0
  %v1097 = vadd.f32 %v755, %v1096
  %1098 = vmatmul.f32.gmra.mxu0 %v900
  %v1099 = vpop.f32.mrf.mxu0
  %v1100 = vadd.f32 %v755, %v1099
  %1101 = vmatmul.f32.gmra.mxu0 %v903
  %v1102 = vpop.f32.mrf.mxu0
  %v1103 = vadd.f32 %v755, %v1102
  %1104 = vmatmul.f32.gmra.mxu0 %v906
  %v1105 = vpop.f32.mrf.mxu0
  %v1106 = vadd.f32 %v755, %v1105
  %1107 = vmatmul.f32.gmra.mxu0 %v909
  %v1108 = vpop.f32.mrf.mxu0
  %v1109 = vadd.f32 %v755, %v1108
  %1110 = vmatmul.f32.gmra.mxu0 %v912
  %v1111 = vpop.f32.mrf.mxu0
  %v1112 = vadd.f32 %v755, %v1111
  %1113 = vmatmul.f32.gmra.mxu0 %v915
  %v1114 = vpop.f32.mrf.mxu0
  %v1115 = vadd.f32 %v755, %v1114
  %1116 = vmatmul.f32.gmra.mxu0 %v918
  %v1117 = vpop.f32.mrf.mxu0
  %v1118 = vadd.f32 %v755, %v1117
  %1119 = vmatmul.f32.gmra.mxu0 %v921
  %v1120 = vpop.f32.mrf.mxu0
  %v1121 = vadd.f32 %v755, %v1120
  %1122 = vmatmul.f32.gmra.mxu0 %v924
  %v1123 = vpop.f32.mrf.mxu0
  %v1124 = vadd.f32 %v755, %v1123
  %1125 = vmatmul.f32.gmra.mxu0 %v927
  %v1126 = vpop.f32.mrf.mxu0
  %v1127 = vadd.f32 %v755, %v1126
  %1128 = vmatmul.f32.gmra.mxu0 %v930
  %v1129 = vpop.f32.mrf.mxu0
  %v1130 = vadd.f32 %v755, %v1129
  %1131 = vmatmul.f32.gmra.mxu0 %v933
  %v1132 = vpop.f32.mrf.mxu0
  %v1133 = vadd.f32 %v755, %v1132
  %1134 = vmatmul.f32.gmra.mxu0 %v936
  %v1135 = vpop.f32.mrf.mxu0
  %v1136 = vadd.f32 %v755, %v1135
  %1137 = vmatmul.f32.gmra.mxu0 %v939
  %v1138 = vpop.f32.mrf.mxu0
  %v1139 = vadd.f32 %v755, %v1138
  %1140 = vdwg.mxu0
  %vm1141 = vcmask 261120
  %1142 = vst.msk [vmem:[%s5] sm:$0xff] %vm1141, %v959
  %1143 = vst.msk [vmem:[%s5 + $0x8] sm:$0xff] %vm1141, %v962
  %1144 = vst.msk [vmem:[%s5 + $0x10] sm:$0xff] %vm1141, %v965
  %1145 = vst.msk [vmem:[%s5 + $0x18] sm:$0xff] %vm1141, %v968
  %1146 = vst.msk [vmem:[%s5 + $0x20] sm:$0xff] %vm1141, %v971
  %1147 = vst.msk [vmem:[%s5 + $0x28] sm:$0xff] %vm1141, %v974
  %1148 = vst.msk [vmem:[%s5 + $0x30] sm:$0xff] %vm1141, %v977
  %1149 = vst.msk [vmem:[%s5 + $0x38] sm:$0xff] %vm1141, %v980
  %1150 = vst.msk [vmem:[%s5 + $0x40] sm:$0xff] %vm1141, %v983
  %1151 = vst.msk [vmem:[%s5 + $0x48] sm:$0xff] %vm1141, %v986
  %1152 = vst.msk [vmem:[%s5 + $0x50] sm:$0xff] %vm1141, %v989
  %1153 = vst.msk [vmem:[%s5 + $0x58] sm:$0xff] %vm1141, %v992
  %1154 = vst.msk [vmem:[%s5 + $0x60] sm:$0xff] %vm1141, %v995
  %1155 = vst.msk [vmem:[%s5 + $0x68] sm:$0xff] %vm1141, %v998
  %1156 = vst.msk [vmem:[%s5 + $0x70] sm:$0xff] %vm1141, %v1001
  %1157 = vst.msk [vmem:[%s5 + $0x78] sm:$0xff] %vm1141, %v1004
  %1158 = vst.msk [vmem:[%s5 + $0x80] sm:$0xff] %vm1141, %v1007
  %1159 = vst.msk [vmem:[%s5 + $0x88] sm:$0xff] %vm1141, %v1010
  %1160 = vst.msk [vmem:[%s5 + $0x90] sm:$0xff] %vm1141, %v1013
  %1161 = vst.msk [vmem:[%s5 + $0x98] sm:$0xff] %vm1141, %v1016
  %1162 = vst.msk [vmem:[%s5 + $0xa0] sm:$0xff] %vm1141, %v1019
  %1163 = vst.msk [vmem:[%s5 + $0xa8] sm:$0xff] %vm1141, %v1022
  %1164 = vst.msk [vmem:[%s5 + $0xb0] sm:$0xff] %vm1141, %v1025
  %1165 = vst.msk [vmem:[%s5 + $0xb8] sm:$0xff] %vm1141, %v1028
  %1166 = vst.msk [vmem:[%s5 + $0xc0] sm:$0xff] %vm1141, %v1031
  %1167 = vst.msk [vmem:[%s5 + $0xc8] sm:$0xff] %vm1141, %v1034
  %1168 = vst.msk [vmem:[%s5 + $0xd0] sm:$0xff] %vm1141, %v1037
  %1169 = vst.msk [vmem:[%s5 + $0xd8] sm:$0xff] %vm1141, %v1040
  %1170 = vst.msk [vmem:[%s5 + $0xe0] sm:$0xff] %vm1141, %v1043
  %1171 = vst.msk [vmem:[%s5 + $0xe8] sm:$0xff] %vm1141, %v1046
  %1172 = vst.msk [vmem:[%s5 + $0xf0] sm:$0xff] %vm1141, %v1049
  %1173 = vst.msk [vmem:[%s5 + $0xf8] sm:$0xff] %vm1141, %v1052
  %1174 = vst.msk [vmem:[%s5 + $0x100] sm:$0xff] %vm1141, %v1055
  %1175 = vst.msk [vmem:[%s5 + $0x108] sm:$0xff] %vm1141, %v1058
  %1176 = vst.msk [vmem:[%s5 + $0x110] sm:$0xff] %vm1141, %v1061
  %1177 = vst.msk [vmem:[%s5 + $0x118] sm:$0xff] %vm1141, %v1064
  %1178 = vst.msk [vmem:[%s5 + $0x120] sm:$0xff] %vm1141, %v1067
  %1179 = vst.msk [vmem:[%s5 + $0x128] sm:$0xff] %vm1141, %v1070
  %1180 = vst.msk [vmem:[%s5 + $0x130] sm:$0xff] %vm1141, %v1073
  %1181 = vst.msk [vmem:[%s5 + $0x138] sm:$0xff] %vm1141, %v1076
  %1182 = vst.msk [vmem:[%s5 + $0x140] sm:$0xff] %vm1141, %v1079
  %1183 = vst.msk [vmem:[%s5 + $0x148] sm:$0xff] %vm1141, %v1082
  %1184 = vst.msk [vmem:[%s5 + $0x150] sm:$0xff] %vm1141, %v1085
  %1185 = vst.msk [vmem:[%s5 + $0x158] sm:$0xff] %vm1141, %v1088
  %1186 = vst.msk [vmem:[%s5 + $0x160] sm:$0xff] %vm1141, %v1091
  %1187 = vst.msk [vmem:[%s5 + $0x168] sm:$0xff] %vm1141, %v1094
  %1188 = vst.msk [vmem:[%s5 + $0x170] sm:$0xff] %vm1141, %v1097
  %1189 = vst.msk [vmem:[%s5 + $0x178] sm:$0xff] %vm1141, %v1100
  %1190 = vst.msk [vmem:[%s5 + $0x180] sm:$0xff] %vm1141, %v1103
  %1191 = vst.msk [vmem:[%s5 + $0x188] sm:$0xff] %vm1141, %v1106
  %1192 = vst.msk [vmem:[%s5 + $0x190] sm:$0xff] %vm1141, %v1109
  %1193 = vst.msk [vmem:[%s5 + $0x198] sm:$0xff] %vm1141, %v1112
  %1194 = vst.msk [vmem:[%s5 + $0x1a0] sm:$0xff] %vm1141, %v1115
  %1195 = vst.msk [vmem:[%s5 + $0x1a8] sm:$0xff] %vm1141, %v1118
  %1196 = vst.msk [vmem:[%s5 + $0x1b0] sm:$0xff] %vm1141, %v1121
  %1197 = vst.msk [vmem:[%s5 + $0x1b8] sm:$0xff] %vm1141, %v1124
  %1198 = vst.msk [vmem:[%s5 + $0x1c0] sm:$0xff] %vm1141, %v1127
  %1199 = vst.msk [vmem:[%s5 + $0x1c8] sm:$0xff] %vm1141, %v1130
  %1200 = vst.msk [vmem:[%s5 + $0x1d0] sm:$0xff] %vm1141, %v1133
  %1201 = vst.msk [vmem:[%s5 + $0x1d8] sm:$0xff] %vm1141, %v1136
  %vm1202 = vcmask 256000
  %1203 = vst.msk [vmem:[%s5 + $0x1e0] sm:$0x7] %vm1202, %v1139
  // Predicated region
  $region22: #{model_forward.2} parent=0 // pred_check
    _
  $region23: #{model_forward.2} parent=0 // pred_check_branch
    %1205 = sbr.rel (0) target = $region25
  $region24: #{model_forward.2} parent=0 // pred_region
    _
  $region25: #{model_forward.2} parent=0 // pred_fallthru
    _
  // Predicated region
  $region26: #{model_forward.2} parent=0 // pred_check
    _
  $region27: #{model_forward.2} parent=0 // pred_check_branch
    %1207 = sbr.rel (0) target = $region29
  $region28: #{model_forward.2} parent=0 // pred_region
    _
  $region29: #{model_forward.2} parent=0 // pred_fallthru
    _

// kernel: model_forward.3
$region0: #{model_forward.3}
  #allocation0 [shape = 'u32[]', space=smem, size = 0x4, offset = 0x4, fixed_abs, tag = 'smem constant byte address 0x4 - core index']
  #allocation1 [shape = 'u32[72,128]{1,0:T(1,128)}', space=vmem, size = 0x9000, scoped, tag = 'internal scratch']
  %s0 = inlined_call_operand.vmem [shape: f32[36,768], index: 0, kind: input, shape index: {}]
  %s1 = inlined_call_operand.vmem [shape: f32[768,48], index: 1, kind: input, shape index: {}]
  %s2 = inlined_call_operand.vmem [shape: f32[1,48], index: 2, kind: input, shape index: {}]
  %s3 = inlined_call_operand.vmem [shape: f32[36,48], index: 3, kind: output, shape index: {}]
  %s4 = sld [smem:[#allocation0]]
  $region22: #{model_forward.3} parent=0
    _
  %s6 = ssub.s32 1, %s4
  %s7 = scalar_select 0, %s6, %s4
  // Predicated region
  $region2: #{model_forward.3} parent=0 // pred_check
    _
  $region3: #{model_forward.3} parent=0 // pred_check_branch
    %9 = sbr.rel (0) target = $region5
  $region4: #{model_forward.3} parent=0 // pred_region
    _
  $region5: #{model_forward.3} parent=0 // pred_fallthru
    _
  // Predicated region
  $region6: #{model_forward.3} parent=0 // pred_check
    _
  $region7: #{model_forward.3} parent=0 // pred_check_branch
    %11 = sbr.rel (0) target = $region9
  $region8: #{model_forward.3} parent=0 // pred_region
    _
  $region9: #{model_forward.3} parent=0 // pred_fallthru
    _
  // Predicated region
  $region10: #{model_forward.3} parent=0 // pred_check
    _
  $region11: #{model_forward.3} parent=0 // pred_check_branch
    %13 = sbr.rel (0) target = $region13
  $region12: #{model_forward.3} parent=0 // pred_region
    _
  $region13: #{model_forward.3} parent=0 // pred_fallthru
    _
  %v14 = vld [vmem:[%s0] sm:$0xff]
  %v15 = vld [vmem:[%s0 + $0x8] sm:$0xff]
  %v16 = vld [vmem:[%s0 + $0x10] sm:$0xff]
  %v17 = vld [vmem:[%s0 + $0x18] sm:$0xff]
  %v18 = vld [vmem:[%s0 + $0x20] sm:$0xff]
  %v19 = vld [vmem:[%s0 + $0x28] sm:$0xff]
  %v20 = vld [vmem:[%s0 + $0x30] sm:$0xff]
  %v21 = vld [vmem:[%s0 + $0x38] sm:$0xff]
  %v22 = vld [vmem:[%s0 + $0x40] sm:$0xff]
  %v23 = vld [vmem:[%s0 + $0x48] sm:$0xff]
  %v24 = vld [vmem:[%s0 + $0x50] sm:$0xff]
  %v25 = vld [vmem:[%s0 + $0x58] sm:$0xff]
  %v26 = vld [vmem:[%s0 + $0x60] sm:$0xff]
  %v27 = vld [vmem:[%s0 + $0x68] sm:$0xff]
  %v28 = vld [vmem:[%s0 + $0x70] sm:$0xff]
  %v29 = vld [vmem:[%s0 + $0x78] sm:$0xff]
  %v30 = vld [vmem:[%s0 + $0x80] sm:$0xff]
  %v31 = vld [vmem:[%s0 + $0x88] sm:$0xff]
  %v32 = vld [vmem:[%s0 + $0x90] sm:$0xff]
  %v33 = vld [vmem:[%s0 + $0x98] sm:$0xff]
  %v34 = vld [vmem:[%s0 + $0xa0] sm:$0xff]
  %v35 = vld [vmem:[%s0 + $0xa8] sm:$0xff]
  %v36 = vld [vmem:[%s0 + $0xb0] sm:$0xff]
  %v37 = vld [vmem:[%s0 + $0xb8] sm:$0xff]
  %v38 = vld [vmem:[%s0 + $0xc0] sm:$0xf]
  %v39 = vld [vmem:[%s0 + $0xc8] sm:$0xf]
  %v40 = vld [vmem:[%s0 + $0xd0] sm:$0xf]
  %v41 = vld [vmem:[%s0 + $0xd8] sm:$0xf]
  %v42 = vld [vmem:[%s0 + $0xe0] sm:$0xf]
  %v43 = vld [vmem:[%s0 + $0xe8] sm:$0xf]
  %v44 = vld [vmem:[%s1] sm:$0xff]
  %v45 = vld [vmem:[%s1 + $0x8] sm:$0xff]
  %v46 = vld [vmem:[%s1 + $0x10] sm:$0xff]
  %v47 = vld [vmem:[%s1 + $0x18] sm:$0xff]
  %v48 = vld [vmem:[%s1 + $0x20] sm:$0xff]
  %v49 = vld [vmem:[%s1 + $0x28] sm:$0xff]
  %v50 = vld [vmem:[%s1 + $0x30] sm:$0xff]
  %v51 = vld [vmem:[%s1 + $0x38] sm:$0xff]
  %v52 = vld [vmem:[%s1 + $0x40] sm:$0xff]
  %v53 = vld [vmem:[%s1 + $0x48] sm:$0xff]
  %v54 = vld [vmem:[%s1 + $0x50] sm:$0xff]
  %v55 = vld [vmem:[%s1 + $0x58] sm:$0xff]
  %v56 = vld [vmem:[%s1 + $0x60] sm:$0xff]
  %v57 = vld [vmem:[%s1 + $0x68] sm:$0xff]
  %v58 = vld [vmem:[%s1 + $0x70] sm:$0xff]
  %v59 = vld [vmem:[%s1 + $0x78] sm:$0xff]
  %v60 = vld [vmem:[%s1 + $0x80] sm:$0xff]
  %v61 = vld [vmem:[%s1 + $0x88] sm:$0xff]
  %v62 = vld [vmem:[%s1 + $0x90] sm:$0xff]
  %v63 = vld [vmem:[%s1 + $0x98] sm:$0xff]
  %v64 = vld [vmem:[%s1 + $0xa0] sm:$0xff]
  %v65 = vld [vmem:[%s1 + $0xa8] sm:$0xff]
  %v66 = vld [vmem:[%s1 + $0xb0] sm:$0xff]
  %v67 = vld [vmem:[%s1 + $0xb8] sm:$0xff]
  %v68 = vld [vmem:[%s1 + $0xc0] sm:$0xff]
  %v69 = vld [vmem:[%s1 + $0xc8] sm:$0xff]
  %v70 = vld [vmem:[%s1 + $0xd0] sm:$0xff]
  %v71 = vld [vmem:[%s1 + $0xd8] sm:$0xff]
  %v72 = vld [vmem:[%s1 + $0xe0] sm:$0xff]
  %v73 = vld [vmem:[%s1 + $0xe8] sm:$0xff]
  %v74 = vld [vmem:[%s1 + $0xf0] sm:$0xff]
  %v75 = vld [vmem:[%s1 + $0xf8] sm:$0xff]
  %v76 = vld [vmem:[%s1 + $0x100] sm:$0xff]
  %v77 = vld [vmem:[%s1 + $0x108] sm:$0xff]
  %v78 = vld [vmem:[%s1 + $0x110] sm:$0xff]
  %v79 = vld [vmem:[%s1 + $0x118] sm:$0xff]
  %v80 = vld [vmem:[%s1 + $0x120] sm:$0xff]
  %v81 = vld [vmem:[%s1 + $0x128] sm:$0xff]
  %v82 = vld [vmem:[%s1 + $0x130] sm:$0xff]
  %v83 = vld [vmem:[%s1 + $0x138] sm:$0xff]
  %v84 = vld [vmem:[%s1 + $0x140] sm:$0xff]
  %v85 = vld [vmem:[%s1 + $0x148] sm:$0xff]
  %v86 = vld [vmem:[%s1 + $0x150] sm:$0xff]
  %v87 = vld [vmem:[%s1 + $0x158] sm:$0xff]
  %v88 = vld [vmem:[%s1 + $0x160] sm:$0xff]
  %v89 = vld [vmem:[%s1 + $0x168] sm:$0xff]
  %v90 = vld [vmem:[%s1 + $0x170] sm:$0xff]
  %v91 = vld [vmem:[%s1 + $0x178] sm:$0xff]
  %v92 = vld [vmem:[%s1 + $0x180] sm:$0xff]
  %v93 = vld [vmem:[%s1 + $0x188] sm:$0xff]
  %v94 = vld [vmem:[%s1 + $0x190] sm:$0xff]
  %v95 = vld [vmem:[%s1 + $0x198] sm:$0xff]
  %v96 = vld [vmem:[%s1 + $0x1a0] sm:$0xff]
  %v97 = vld [vmem:[%s1 + $0x1a8] sm:$0xff]
  %v98 = vld [vmem:[%s1 + $0x1b0] sm:$0xff]
  %v99 = vld [vmem:[%s1 + $0x1b8] sm:$0xff]
  %v100 = vld [vmem:[%s1 + $0x1c0] sm:$0xff]
  %v101 = vld [vmem:[%s1 + $0x1c8] sm:$0xff]
  %v102 = vld [vmem:[%s1 + $0x1d0] sm:$0xff]
  %v103 = vld [vmem:[%s1 + $0x1d8] sm:$0xff]
  %v104 = vld [vmem:[%s1 + $0x1e0] sm:$0xff]
  %v105 = vld [vmem:[%s1 + $0x1e8] sm:$0xff]
  %v106 = vld [vmem:[%s1 + $0x1f0] sm:$0xff]
  %v107 = vld [vmem:[%s1 + $0x1f8] sm:$0xff]
  %v108 = vld [vmem:[%s1 + $0x200] sm:$0xff]
  %v109 = vld [vmem:[%s1 + $0x208] sm:$0xff]
  %v110 = vld [vmem:[%s1 + $0x210] sm:$0xff]
  %v111 = vld [vmem:[%s1 + $0x218] sm:$0xff]
  %v112 = vld [vmem:[%s1 + $0x220] sm:$0xff]
  %v113 = vld [vmem:[%s1 + $0x228] sm:$0xff]
  %v114 = vld [vmem:[%s1 + $0x230] sm:$0xff]
  %v115 = vld [vmem:[%s1 + $0x238] sm:$0xff]
  %v116 = vld [vmem:[%s1 + $0x240] sm:$0xff]
  %v117 = vld [vmem:[%s1 + $0x248] sm:$0xff]
  %v118 = vld [vmem:[%s1 + $0x250] sm:$0xff]
  %v119 = vld [vmem:[%s1 + $0x258] sm:$0xff]
  %v120 = vld [vmem:[%s1 + $0x260] sm:$0xff]
  %v121 = vld [vmem:[%s1 + $0x268] sm:$0xff]
  %v122 = vld [vmem:[%s1 + $0x270] sm:$0xff]
  %v123 = vld [vmem:[%s1 + $0x278] sm:$0xff]
  %v124 = vld [vmem:[%s1 + $0x280] sm:$0xff]
  %v125 = vld [vmem:[%s1 + $0x288] sm:$0xff]
  %v126 = vld [vmem:[%s1 + $0x290] sm:$0xff]
  %v127 = vld [vmem:[%s1 + $0x298] sm:$0xff]
  %v128 = vld [vmem:[%s1 + $0x2a0] sm:$0xff]
  %v129 = vld [vmem:[%s1 + $0x2a8] sm:$0xff]
  %v130 = vld [vmem:[%s1 + $0x2b0] sm:$0xff]
  %v131 = vld [vmem:[%s1 + $0x2b8] sm:$0xff]
  %v132 = vld [vmem:[%s1 + $0x2c0] sm:$0xff]
  %v133 = vld [vmem:[%s1 + $0x2c8] sm:$0xff]
  %v134 = vld [vmem:[%s1 + $0x2d0] sm:$0xff]
  %v135 = vld [vmem:[%s1 + $0x2d8] sm:$0xff]
  %v136 = vld [vmem:[%s1 + $0x2e0] sm:$0xff]
  %v137 = vld [vmem:[%s1 + $0x2e8] sm:$0xff]
  %v138 = vld [vmem:[%s1 + $0x2f0] sm:$0xff]
  %v139 = vld [vmem:[%s1 + $0x2f8] sm:$0xff]
  %v140 = vld [vmem:[%s2] sm:$0x1]
  %v142 = vperm.slane %v140, 0
  %144 = vmatpush.msra.mxu0 %v59
  %145 = vmatpush.msra.mxu0 %v58
  %146 = vmatpush.msra.mxu0 %v57
  %147 = vmatpush.msra.mxu0 %v56
  %148 = vmatpush.msra.mxu0 %v55
  %149 = vmatpush.msra.mxu0 %v54
  %150 = vmatpush.msra.mxu0 %v53
  %151 = vmatpush.msra.mxu0 %v52
  %152 = vmatpush.msra.mxu0 %v51
  %153 = vmatpush.msra.mxu0 %v50
  %154 = vmatpush.msra.mxu0 %v49
  %155 = vmatpush.msra.mxu0 %v48
  %156 = vmatpush.msra.mxu0 %v47
  %157 = vmatpush.msra.mxu0 %v46
  %158 = vmatpush.msra.mxu0 %v45
  %159 = vmatpush.msra.mxu0 %v44
  %160 = vmatmul.f32.gmra.mxu0 %v14
  %v161 = vpop.f32.mrf.mxu0
  %v162 = vadd.f32 %v142, %v161
  %163 = vmatmul.f32.gmra.mxu0 %v20
  %v164 = vpop.f32.mrf.mxu0
  %v165 = vadd.f32 %v142, %v164
  %166 = vmatmul.f32.gmra.mxu0 %v26
  %v167 = vpop.f32.mrf.mxu0
  %v168 = vadd.f32 %v142, %v167
  %169 = vmatmul.f32.gmra.mxu0 %v32
  %v170 = vpop.f32.mrf.mxu0
  %v171 = vadd.f32 %v142, %v170
  %172 = vmatmul.f32.gmra.mxu0 %v38
  %v173 = vpop.f32.mrf.mxu0
  %v174 = vadd.f32 %v142, %v173
  %175 = vdwg.mxu0
  %176 = vmatpush.msra.mxu0 %v75
  %177 = vmatpush.msra.mxu0 %v74
  %178 = vmatpush.msra.mxu0 %v73
  %179 = vmatpush.msra.mxu0 %v72
  %180 = vmatpush.msra.mxu0 %v71
  %181 = vmatpush.msra.mxu0 %v70
  %182 = vmatpush.msra.mxu0 %v69
  %183 = vmatpush.msra.mxu0 %v68
  %184 = vmatpush.msra.mxu0 %v67
  %185 = vmatpush.msra.mxu0 %v66
  %186 = vmatpush.msra.mxu0 %v65
  %187 = vmatpush.msra.mxu0 %v64
  %188 = vmatpush.msra.mxu0 %v63
  %189 = vmatpush.msra.mxu0 %v62
  %190 = vmatpush.msra.mxu0 %v61
  %191 = vmatpush.msra.mxu0 %v60
  %192 = vmatmul.f32.gmra.mxu0 %v15
  %v193 = vpop.f32.mrf.mxu0
  %v194 = vadd.f32 %v162, %v193
  %195 = vmatmul.f32.gmra.mxu0 %v21
  %v196 = vpop.f32.mrf.mxu0
  %v197 = vadd.f32 %v165, %v196
  %198 = vmatmul.f32.gmra.mxu0 %v27
  %v199 = vpop.f32.mrf.mxu0
  %v200 = vadd.f32 %v168, %v199
  %201 = vmatmul.f32.gmra.mxu0 %v33
  %v202 = vpop.f32.mrf.mxu0
  %v203 = vadd.f32 %v171, %v202
  %204 = vmatmul.f32.gmra.mxu0 %v39
  %v205 = vpop.f32.mrf.mxu0
  %v206 = vadd.f32 %v174, %v205
  %207 = vdwg.mxu0
  %208 = vmatpush.msra.mxu0 %v91
  %209 = vmatpush.msra.mxu0 %v90
  %210 = vmatpush.msra.mxu0 %v89
  %211 = vmatpush.msra.mxu0 %v88
  %212 = vmatpush.msra.mxu0 %v87
  %213 = vmatpush.msra.mxu0 %v86
  %214 = vmatpush.msra.mxu0 %v85
  %215 = vmatpush.msra.mxu0 %v84
  %216 = vmatpush.msra.mxu0 %v83
  %217 = vmatpush.msra.mxu0 %v82
  %218 = vmatpush.msra.mxu0 %v81
  %219 = vmatpush.msra.mxu0 %v80
  %220 = vmatpush.msra.mxu0 %v79
  %221 = vmatpush.msra.mxu0 %v78
  %222 = vmatpush.msra.mxu0 %v77
  %223 = vmatpush.msra.mxu0 %v76
  %224 = vmatmul.f32.gmra.mxu0 %v16
  %v225 = vpop.f32.mrf.mxu0
  %v226 = vadd.f32 %v194, %v225
  %227 = vmatmul.f32.gmra.mxu0 %v22
  %v228 = vpop.f32.mrf.mxu0
  %v229 = vadd.f32 %v197, %v228
  %230 = vmatmul.f32.gmra.mxu0 %v28
  %v231 = vpop.f32.mrf.mxu0
  %v232 = vadd.f32 %v200, %v231
  %233 = vmatmul.f32.gmra.mxu0 %v34
  %v234 = vpop.f32.mrf.mxu0
  %v235 = vadd.f32 %v203, %v234
  %236 = vmatmul.f32.gmra.mxu0 %v40
  %v237 = vpop.f32.mrf.mxu0
  %v238 = vadd.f32 %v206, %v237
  %239 = vdwg.mxu0
  %240 = vmatpush.msra.mxu0 %v107
  %241 = vmatpush.msra.mxu0 %v106
  %242 = vmatpush.msra.mxu0 %v105
  %243 = vmatpush.msra.mxu0 %v104
  %244 = vmatpush.msra.mxu0 %v103
  %245 = vmatpush.msra.mxu0 %v102
  %246 = vmatpush.msra.mxu0 %v101
  %247 = vmatpush.msra.mxu0 %v100
  %248 = vmatpush.msra.mxu0 %v99
  %249 = vmatpush.msra.mxu0 %v98
  %250 = vmatpush.msra.mxu0 %v97
  %251 = vmatpush.msra.mxu0 %v96
  %252 = vmatpush.msra.mxu0 %v95
  %253 = vmatpush.msra.mxu0 %v94
  %254 = vmatpush.msra.mxu0 %v93
  %255 = vmatpush.msra.mxu0 %v92
  %256 = vmatmul.f32.gmra.mxu0 %v17
  %v257 = vpop.f32.mrf.mxu0
  %v258 = vadd.f32 %v226, %v257
  %259 = vmatmul.f32.gmra.mxu0 %v23
  %v260 = vpop.f32.mrf.mxu0
  %v261 = vadd.f32 %v229, %v260
  %262 = vmatmul.f32.gmra.mxu0 %v29
  %v263 = vpop.f32.mrf.mxu0
  %v264 = vadd.f32 %v232, %v263
  %265 = vmatmul.f32.gmra.mxu0 %v35
  %v266 = vpop.f32.mrf.mxu0
  %v267 = vadd.f32 %v235, %v266
  %268 = vmatmul.f32.gmra.mxu0 %v41
  %v269 = vpop.f32.mrf.mxu0
  %v270 = vadd.f32 %v238, %v269
  %271 = vdwg.mxu0
  %272 = vmatpush.msra.mxu0 %v123
  %273 = vmatpush.msra.mxu0 %v122
  %274 = vmatpush.msra.mxu0 %v121
  %275 = vmatpush.msra.mxu0 %v120
  %276 = vmatpush.msra.mxu0 %v119
  %277 = vmatpush.msra.mxu0 %v118
  %278 = vmatpush.msra.mxu0 %v117
  %279 = vmatpush.msra.mxu0 %v116
  %280 = vmatpush.msra.mxu0 %v115
  %281 = vmatpush.msra.mxu0 %v114
  %282 = vmatpush.msra.mxu0 %v113
  %283 = vmatpush.msra.mxu0 %v112
  %284 = vmatpush.msra.mxu0 %v111
  %285 = vmatpush.msra.mxu0 %v110
  %286 = vmatpush.msra.mxu0 %v109
  %287 = vmatpush.msra.mxu0 %v108
  %288 = vmatmul.f32.gmra.mxu0 %v18
  %v289 = vpop.f32.mrf.mxu0
  %v290 = vadd.f32 %v258, %v289
  %291 = vmatmul.f32.gmra.mxu0 %v24
  %v292 = vpop.f32.mrf.mxu0
  %v293 = vadd.f32 %v261, %v292
  %294 = vmatmul.f32.gmra.mxu0 %v30
  %v295 = vpop.f32.mrf.mxu0
  %v296 = vadd.f32 %v264, %v295
  %297 = vmatmul.f32.gmra.mxu0 %v36
  %v298 = vpop.f32.mrf.mxu0
  %v299 = vadd.f32 %v267, %v298
  %300 = vmatmul.f32.gmra.mxu0 %v42
  %v301 = vpop.f32.mrf.mxu0
  %v302 = vadd.f32 %v270, %v301
  %303 = vdwg.mxu0
  %304 = vmatpush.msra.mxu0 %v139
  %305 = vmatpush.msra.mxu0 %v138
  %306 = vmatpush.msra.mxu0 %v137
  %307 = vmatpush.msra.mxu0 %v136
  %308 = vmatpush.msra.mxu0 %v135
  %309 = vmatpush.msra.mxu0 %v134
  %310 = vmatpush.msra.mxu0 %v133
  %311 = vmatpush.msra.mxu0 %v132
  %312 = vmatpush.msra.mxu0 %v131
  %313 = vmatpush.msra.mxu0 %v130
  %314 = vmatpush.msra.mxu0 %v129
  %315 = vmatpush.msra.mxu0 %v128
  %316 = vmatpush.msra.mxu0 %v127
  %317 = vmatpush.msra.mxu0 %v126
  %318 = vmatpush.msra.mxu0 %v125
  %319 = vmatpush.msra.mxu0 %v124
  %320 = vmatmul.f32.gmra.mxu0 %v19
  %v321 = vpop.f32.mrf.mxu0
  %v322 = vadd.f32 %v290, %v321
  %323 = vmatmul.f32.gmra.mxu0 %v25
  %v324 = vpop.f32.mrf.mxu0
  %v325 = vadd.f32 %v293, %v324
  %326 = vmatmul.f32.gmra.mxu0 %v31
  %v327 = vpop.f32.mrf.mxu0
  %v328 = vadd.f32 %v296, %v327
  %329 = vmatmul.f32.gmra.mxu0 %v37
  %v330 = vpop.f32.mrf.mxu0
  %v331 = vadd.f32 %v299, %v330
  %332 = vmatmul.f32.gmra.mxu0 %v43
  %v333 = vpop.f32.mrf.mxu0
  %v334 = vadd.f32 %v302, %v333
  %335 = vdwg.mxu0
  %v336 = vxor.u32 %v322, 2147483648
  %v337 = vxor.u32 %v325, 2147483648
  %v338 = vxor.u32 %v328, 2147483648
  %v339 = vxor.u32 %v331, 2147483648
  %v340 = vxor.u32 %v334, 2147483648
  %v341 = vmul.f32 %v336, 1.442695
  %v342 = vpow.pop %v341
  %v343 = vmul.f32 %v337, 1.442695
  %v344 = vpow.pop %v343
  %v345 = vmul.f32 %v338, 1.442695
  %v346 = vpow.pop %v345
  %v347 = vmul.f32 %v339, 1.442695
  %v348 = vpow.pop %v347
  %v349 = vmul.f32 %v340, 1.442695
  %v350 = vpow.pop %v349
  %v351 = vadd.f32 %v342, 1.0
  %v352 = vadd.f32 %v344, 1.0
  %v353 = vadd.f32 %v346, 1.0
  %v354 = vadd.f32 %v348, 1.0
  %v355 = vadd.f32 %v350, 1.0
  %v356 = vrcp.pop %v351
  %v357 = vmul.f32 %v351, %v356
  %v358 = vsub.f32 1.0, %v357
  %v359 = vmul.f32 %v356, %v358
  %v360 = vadd.f32 %v356, %v359
  %vm361 = vweird.f32 %v351
  %vm362 = vweird.f32 %v356
  %vm363 = vmor %vm361, %vm362
  %v364 = vsel %vm363, %v356, %v360
  %v365 = vand.u32 2147483647, %v351
  %vm366 = vcmp.eq.f32.partialorder %v365, 8.507059e+37
  %v367 = vand.u32 %v351, 2147483648
  %v368 = vor.u32 1.1754944e-38, %v367
  %v369 = vsel %vm366, %v368, %v364
  %v370 = vmul.f32 1.0, %v369
  %v371 = vrcp.pop %v352
  %v372 = vmul.f32 %v352, %v371
  %v373 = vsub.f32 1.0, %v372
  %v374 = vmul.f32 %v371, %v373
  %v375 = vadd.f32 %v371, %v374
  %vm376 = vweird.f32 %v352
  %vm377 = vweird.f32 %v371
  %vm378 = vmor %vm376, %vm377
  %v379 = vsel %vm378, %v371, %v375
  %v380 = vand.u32 2147483647, %v352
  %vm381 = vcmp.eq.f32.partialorder %v380, 8.507059e+37
  %v382 = vand.u32 %v352, 2147483648
  %v383 = vor.u32 1.1754944e-38, %v382
  %v384 = vsel %vm381, %v383, %v379
  %v385 = vmul.f32 1.0, %v384
  %v386 = vrcp.pop %v353
  %v387 = vmul.f32 %v353, %v386
  %v388 = vsub.f32 1.0, %v387
  %v389 = vmul.f32 %v386, %v388
  %v390 = vadd.f32 %v386, %v389
  %vm391 = vweird.f32 %v353
  %vm392 = vweird.f32 %v386
  %vm393 = vmor %vm391, %vm392
  %v394 = vsel %vm393, %v386, %v390
  %v395 = vand.u32 2147483647, %v353
  %vm396 = vcmp.eq.f32.partialorder %v395, 8.507059e+37
  %v397 = vand.u32 %v353, 2147483648
  %v398 = vor.u32 1.1754944e-38, %v397
  %v399 = vsel %vm396, %v398, %v394
  %v400 = vmul.f32 1.0, %v399
  %v401 = vrcp.pop %v354
  %v402 = vmul.f32 %v354, %v401
  %v403 = vsub.f32 1.0, %v402
  %v404 = vmul.f32 %v401, %v403
  %v405 = vadd.f32 %v401, %v404
  %vm406 = vweird.f32 %v354
  %vm407 = vweird.f32 %v401
  %vm408 = vmor %vm406, %vm407
  %v409 = vsel %vm408, %v401, %v405
  %v410 = vand.u32 2147483647, %v354
  %vm411 = vcmp.eq.f32.partialorder %v410, 8.507059e+37
  %v412 = vand.u32 %v354, 2147483648
  %v413 = vor.u32 1.1754944e-38, %v412
  %v414 = vsel %vm411, %v413, %v409
  %v415 = vmul.f32 1.0, %v414
  %v416 = vrcp.pop %v355
  %v417 = vmul.f32 %v355, %v416
  %v418 = vsub.f32 1.0, %v417
  %v419 = vmul.f32 %v416, %v418
  %v420 = vadd.f32 %v416, %v419
  %vm421 = vweird.f32 %v355
  %vm422 = vweird.f32 %v416
  %vm423 = vmor %vm421, %vm422
  %v424 = vsel %vm423, %v416, %v420
  %v425 = vand.u32 2147483647, %v355
  %vm426 = vcmp.eq.f32.partialorder %v425, 8.507059e+37
  %v427 = vand.u32 %v355, 2147483648
  %v428 = vor.u32 1.1754944e-38, %v427
  %v429 = vsel %vm426, %v428, %v424
  %v430 = vmul.f32 1.0, %v429
  %vm431 = vcmask 392192
  %432 = vst.msk [vmem:[%s3] sm:$0xff] %vm431, %v370
  %433 = vst.msk [vmem:[%s3 + $0x8] sm:$0xff] %vm431, %v385
  %434 = vst.msk [vmem:[%s3 + $0x10] sm:$0xff] %vm431, %v400
  %435 = vst.msk [vmem:[%s3 + $0x18] sm:$0xff] %vm431, %v415
  %vm436 = vcmask 388096
  %437 = vst.msk [vmem:[%s3 + $0x20] sm:$0xf] %vm436, %v430
  // Predicated region
  $region14: #{model_forward.3} parent=0 // pred_check
    _
  $region15: #{model_forward.3} parent=0 // pred_check_branch
    %439 = sbr.rel (0) target = $region17
  $region16: #{model_forward.3} parent=0 // pred_region
    _
  $region17: #{model_forward.3} parent=0 // pred_fallthru
    _
  // Predicated region
  $region18: #{model_forward.3} parent=0 // pred_check
    _
  $region19: #{model_forward.3} parent=0 // pred_check_branch
    %441 = sbr.rel (0) target = $region21
  $region20: #{model_forward.3} parent=0 // pred_region
    _
  $region21: #{model_forward.3} parent=0 // pred_fallthru
    _

</llo_original>
